<compile_context>
chip_gen: v7x
topology: tpu7x:2x2x1
jax: 0.10.0
libtpu: 0.0.40
codegen_flags: <defaults>
</compile_context>

<pallas_src>
import jax
import jax.numpy as jnp
from jax.experimental import pallas as pl
from jax.experimental.pallas import tpu as pltpu


_NEG_FILL = -1e30   # finite stand-in for -inf; masked lanes underflow to 0 in exp


# ----------------------------------------------------------------------------
# Fused kernel: one grid step = one batch element, all heads processed inside.
# ----------------------------------------------------------------------------
def _make_fused_kernel(num_heads, t_q, t_k, embed_dim, head_dim, scaling):
    H, T1, Tk, E, Dh = num_heads, t_q, t_k, embed_dim, head_dim
    inv_h = 1.0 / H

    def kernel(q_ref, kt_ref, v_ref, mask_ref,
               wq_ref, wk_ref, wv_ref, wo_ref,
               bq_ref, bk_ref, bv_ref, bo_ref,
               attn_ref, weights_ref):
        qb = q_ref[0]        # (T1, E)
        kbT = kt_ref[0]      # (E, Tk)   key fed pre-transposed by the wrapper
        vb = v_ref[0]        # (Tk, E)

        # Additive padding mask: broadcast ONCE (outside the head loop).
        mask_add = jnp.broadcast_to(mask_ref[0], (T1, Tk))    # (T1, Tk), 0 or -1e30

        # Full-E-width projections — single MXU pass each, standard contractions.
        q_all = (jnp.dot(qb, wq_ref[...], preferred_element_type=jnp.float32)
                 + bq_ref[...]) * scaling                      # (T1, E)
        kT_all = (jnp.dot(wk_ref[...], kbT, preferred_element_type=jnp.float32)
                  + bk_ref[...])                               # (E, Tk) == K^T
        v_all = (jnp.dot(vb, wv_ref[...], preferred_element_type=jnp.float32)
                 + bv_ref[...])                                # (Tk, E)

        w_sum = jnp.zeros((T1, Tk), jnp.float32)
        o_parts = []
        # Static head loop: H is small & fixed; static lane offsets enable the fused
        # concat + single output projection below.
        # TODO(synk): at production H, switch to lax.fori_loop(unroll=True) writing o_h
        # into a (T1,E) VMEM scratch slab to cap vreg live ranges.
        for h in range(H):
            lo, hi = h * Dh, (h + 1) * Dh
            s = jnp.dot(q_all[:, lo:hi], kT_all[lo:hi, :],
                        preferred_element_type=jnp.float32) + mask_add   # (T1, Tk)
            p = jnp.exp(s - jnp.max(s, axis=-1, keepdims=True))
            # approx=False keeps the 1e-5 weights tolerance; approx=True would move the
            # divide to the (idle) EUP slot if the tolerance can be loosened.
            w = p * pl.reciprocal(jnp.sum(p, axis=-1, keepdims=True), approx=False)
            o_parts.append(jnp.dot(w, v_all[:, lo:hi],
                                   preferred_element_type=jnp.float32))  # (T1, Dh)
            w_sum = w_sum + w

        # Head merge + output projection fused into ONE full-depth matmul.
        o_merged = jnp.concatenate(o_parts, axis=1)                       # (T1, E)
        attn = jnp.dot(o_merged, wo_ref[...],
                       preferred_element_type=jnp.float32) + bo_ref[...]  # (T1, E)

        attn_ref[0] = attn.astype(attn_ref.dtype)                 # lane width E
        weights_ref[0] = (w_sum * inv_h).astype(weights_ref.dtype)  # head-averaged

    return kernel


# ----------------------------------------------------------------------------
# FlatHANAttention forward (wrapper = fairseq MultiheadAttention forward, eval mode,
# dropout=0.0, static_kv=True, need_weights=True).
# ----------------------------------------------------------------------------
def flat_han_attention(query, key, value, key_padding_mask, params, num_heads):
    """
    query: (T1, B, E), key/value: (Tk, B, E), key_padding_mask: (B, Tk) bool (True = pad)
    returns (attn: (T1, B, E), attn_weights: (B, T1, Tk) averaged over heads)
    """
    T1, B, E = query.shape
    Tk = key.shape[0]
    H = num_heads
    Dh = E // H
    scaling = Dh ** -0.5

    # Boundary layout plumbing: batch-leading blocks; key pre-transposed so the kernel
    # computes K^T with a standard contraction (zero in-kernel transposes).
    q_b = jnp.transpose(query, (1, 0, 2))    # (B, T1, E)
    kT_b = jnp.transpose(key, (1, 2, 0))     # (B, E, Tk)
    v_b = jnp.transpose(value, (1, 0, 2))    # (B, Tk, E)
    mask_add_b = jnp.where(key_padding_mask, _NEG_FILL, 0.0).astype(jnp.float32)
    mask_add_b = mask_add_b.reshape(B, 1, Tk)

    # Weights pre-transposed once so every kernel dot is (M,K)@(K,N).
    wq_t = jnp.transpose(params["wq"])       # (E_in, E_out): x @ Wq.T
    wk_f = params["wk"]                      # (E_out, E_in): Wk @ kb^T
    wv_t = jnp.transpose(params["wv"])       # (E_in, E_out)
    wo_t = jnp.transpose(params["wo"])       # (E_in, E_out)
    bq_r = params["bq"].reshape(1, E)
    bk_r = params["bk"].reshape(E, 1)        # column bias for the transposed K path
    bv_r = params["bv"].reshape(1, E)
    bo_r = params["bo"].reshape(1, E)

    kernel = _make_fused_kernel(H, T1, Tk, E, Dh, scaling)

    const2 = lambda b: (0, 0)   # grid-invariant (resident) blocks
    attn_b, attn_w = pl.pallas_call(
        kernel,
        out_shape=(
            jax.ShapeDtypeStruct((B, T1, E), jnp.float32),
            jax.ShapeDtypeStruct((B, T1, Tk), jnp.float32),
        ),
        grid=(B,),
        in_specs=[
            pl.BlockSpec((1, T1, E), lambda b: (b, 0, 0)),    # query slab of batch b
            pl.BlockSpec((1, E, Tk), lambda b: (b, 0, 0)),    # key slab (pre-transposed)
            pl.BlockSpec((1, Tk, E), lambda b: (b, 0, 0)),    # value slab
            pl.BlockSpec((1, 1, Tk), lambda b: (b, 0, 0)),    # additive padding mask
            pl.BlockSpec((E, E), const2),                     # Wq^T
            pl.BlockSpec((E, E), const2),                     # Wk
            pl.BlockSpec((E, E), const2),                     # Wv^T
            pl.BlockSpec((E, E), const2),                     # Wo^T
            pl.BlockSpec((1, E), const2),                     # bq (row)
            pl.BlockSpec((E, 1), const2),                     # bk (column, for K^T)
            pl.BlockSpec((1, E), const2),                     # bv (row)
            pl.BlockSpec((1, E), const2),                     # bo (row)
        ],
        out_specs=(
            pl.BlockSpec((1, T1, E), lambda b: (b, 0, 0)),
            pl.BlockSpec((1, T1, Tk), lambda b: (b, 0, 0)),
        ),
        compiler_params=pltpu.CompilerParams(
            dimension_semantics=("parallel",),
            # Known-good at these shapes on all gens; raise (v5e/v6e) and re-derive
            # batch/T1 tiling (v7x, 64 MiB VMEM) for production sizes.
            vmem_limit_bytes=32 * 1024 * 1024,
        ),
    )(q_b, kT_b, v_b, mask_add_b, wq_t, wk_f, wv_t, wo_t, bq_r, bk_r, bv_r, bo_r)

    attn = jnp.transpose(attn_b, (1, 0, 2))   # back to fairseq time-major (T1, B, E)
    return attn, attn_w


# ----------------------------------------------------------------------------
# pure-JAX reference (faithful to fairseq MultiheadAttention math)
# ----------------------------------------------------------------------------
def ref_flat_han_attention(query, key, value, key_padding_mask, params, num_heads):
    T1, B, E = query.shape
    Tk = key.shape[0]
    H = num_heads
    Dh = E // H
    scaling = Dh ** -0.5

    q = (query.reshape(T1 * B, E) @ params["wq"].T + params["bq"]) * scaling
    k = key.reshape(Tk * B, E) @ params["wk"].T + params["bk"]
    v = value.reshape(Tk * B, E) @ params["wv"].T + params["bv"]

    q = q.reshape(T1, B * H, Dh).transpose(1, 0, 2)
    k = k.reshape(Tk, B * H, Dh).transpose(1, 0, 2)
    v = v.reshape(Tk, B * H, Dh).transpose(1, 0, 2)

    s = jnp.einsum("btd,bsd->bts", q, k)
    mask = jnp.repeat(key_padding_mask[:, None, None, :], H, axis=1).reshape(B * H, 1, Tk)
    s = jnp.where(mask, -jnp.inf, s)
    w = jax.nn.softmax(s, axis=-1)
    o = jnp.einsum("bts,bsd->btd", w, v)

    o = o.transpose(1, 0, 2).reshape(T1 * B, E)
    attn = (o @ params["wo"].T + params["bo"]).reshape(T1, B, E)
    attn_weights = w.reshape(B, H, T1, Tk).mean(axis=1)
    return attn, attn_weights


# ----------------------------------------------------------------------------
# deterministic parameter init (fairseq-style xavier uniform, zero biases)
# ----------------------------------------------------------------------------
def init_params(key, embed_dim):
    def xavier(k, shape, gain=1.0):
        fan_in, fan_out = shape[1], shape[0]
        bound = gain * (6.0 / (fan_in + fan_out)) ** 0.5
        return jax.random.uniform(k, shape, jnp.float32, -bound, bound)

    ks = jax.random.split(key, 4)
    gain = 1.0 / (2.0 ** 0.5)  # qkv_same_dim init in fairseq
    return {
        "wq": xavier(ks[0], (embed_dim, embed_dim), gain),
        "wk": xavier(ks[1], (embed_dim, embed_dim), gain),
        "wv": xavier(ks[2], (embed_dim, embed_dim), gain),
        "wo": xavier(ks[3], (embed_dim, embed_dim), 1.0),
        "bq": jnp.zeros((embed_dim,), jnp.float32),
        "bk": jnp.zeros((embed_dim,), jnp.float32),
        "bv": jnp.zeros((embed_dim,), jnp.float32),
        "bo": jnp.zeros((embed_dim,), jnp.float32),
    }


# ----------------------------------------------------------------------------
if __name__ == "__main__":
    # small shapes consistent with the forward contract:
    #   query: T1 x B x E, key/value: Tk x B x E, key_padding_mask: B x Tk
    T1, Tk, B, E, H = 8, 16, 2, 32, 4
    n_context = 2  # stored by FlatHANAttention.__init__ but unused in forward

    root = jax.random.PRNGKey(0)
    kq, kk, kv, kp = jax.random.split(root, 4)

    query = jax.random.normal(kq, (T1, B, E), jnp.float32)
    key = jax.random.normal(kk, (Tk, B, E), jnp.float32)
    value = jax.random.normal(kv, (Tk, B, E), jnp.float32)
    # True = padded key position; batch 0 has no padding, batch 1 pads the last 4 keys
    lens = jnp.array([Tk, Tk - 4], jnp.int32)
    key_padding_mask = jnp.arange(Tk)[None, :] >= lens[:, None]

    params = init_params(kp, E)

    attn, attn_w = jax.jit(flat_han_attention, static_argnums=(5,))(
        query, key, value, key_padding_mask, params, H
    )
    jax.block_until_ready((attn, attn_w))

    # correctness check against pure-JAX reference
    ref_attn, ref_w = ref_flat_han_attention(query, key, value, key_padding_mask, params, H)
    assert attn.shape == (T1, B, E) and attn_w.shape == (B, T1, Tk)
    assert jnp.allclose(attn, ref_attn, atol=1e-4, rtol=1e-4)
    assert jnp.allclose(attn_w, ref_w, atol=1e-5, rtol=1e-4)

    # NOTE: fully-padded rows give uniform weights here (finite -1e30 mask fill) instead of
    # NaN (torch masked_fill(-inf) + softmax); no such rows exist in this test or normal use.
    # TODO(synk): squeeze_pad / prepare_attention_input are host-side ragged gather/pad
    # preprocessing (data-dependent shapes) and are left outside the kernel.
    print("KERNEL_OK")
</pallas_src>

<mosaic_0001>
module attributes {stable_mosaic.version = 11 : i64} {
  func.func @kernel(%arg0: i32, %arg1: memref<1x8x32xf32, #tpu.memory_space<vmem>>, %arg2: memref<1x32x16xf32, #tpu.memory_space<vmem>>, %arg3: memref<1x16x32xf32, #tpu.memory_space<vmem>>, %arg4: memref<1x1x16xf32, #tpu.memory_space<vmem>>, %arg5: memref<32x32xf32, #tpu.memory_space<vmem>>, %arg6: memref<32x32xf32, #tpu.memory_space<vmem>>, %arg7: memref<32x32xf32, #tpu.memory_space<vmem>>, %arg8: memref<32x32xf32, #tpu.memory_space<vmem>>, %arg9: memref<1x32xf32, #tpu.memory_space<vmem>>, %arg10: memref<32x1xf32, #tpu.memory_space<vmem>>, %arg11: memref<1x32xf32, #tpu.memory_space<vmem>>, %arg12: memref<1x32xf32, #tpu.memory_space<vmem>>, %arg13: memref<1x8x32xf32, #tpu.memory_space<vmem>>, %arg14: memref<1x8x16xf32, #tpu.memory_space<vmem>>) attributes {dimension_semantics = [#tpu.dimension_semantics<parallel>], iteration_bounds = array<i64: 2>, scalar_prefetch = 0 : i64, scratch_operands = 0 : i64, tpu.core_type = #tpu.core_type<tc>, window_params = [{transform_indices = @transform_0, window_bounds = array<i64: 1, 8, 32>}, {transform_indices = @transform_1, window_bounds = array<i64: 1, 32, 16>}, {transform_indices = @transform_2, window_bounds = array<i64: 1, 16, 32>}, {transform_indices = @transform_3, window_bounds = array<i64: 1, 1, 16>}, {pipeline_mode = #tpu.pipeline_mode<synchronous>, transform_indices = @transform_4, window_bounds = array<i64: 32, 32>}, {pipeline_mode = #tpu.pipeline_mode<synchronous>, transform_indices = @transform_5, window_bounds = array<i64: 32, 32>}, {pipeline_mode = #tpu.pipeline_mode<synchronous>, transform_indices = @transform_6, window_bounds = array<i64: 32, 32>}, {pipeline_mode = #tpu.pipeline_mode<synchronous>, transform_indices = @transform_7, window_bounds = array<i64: 32, 32>}, {pipeline_mode = #tpu.pipeline_mode<synchronous>, transform_indices = @transform_8, window_bounds = array<i64: 1, 32>}, {pipeline_mode = #tpu.pipeline_mode<synchronous>, transform_indices = @transform_9, window_bounds = array<i64: 32, 1>}, {pipeline_mode = #tpu.pipeline_mode<synchronous>, transform_indices = @transform_10, window_bounds = array<i64: 1, 32>}, {pipeline_mode = #tpu.pipeline_mode<synchronous>, transform_indices = @transform_11, window_bounds = array<i64: 1, 32>}, {transform_indices = @transform_12, window_bounds = array<i64: 1, 8, 32>}, {transform_indices = @transform_13, window_bounds = array<i64: 1, 8, 16>}]} {
    %c0 = arith.constant 0 : index
    %c0_0 = arith.constant 0 : index
    %c0_1 = arith.constant 0 : index
    %0 = vector.load %arg1[%c0, %c0_0, %c0_1] : memref<1x8x32xf32, #tpu.memory_space<vmem>>, vector<1x8x32xf32>
    %1 = vector.shape_cast %0 : vector<1x8x32xf32> to vector<8x32xf32>
    %c0_2 = arith.constant 0 : index
    %c0_3 = arith.constant 0 : index
    %c0_4 = arith.constant 0 : index
    %2 = vector.load %arg2[%c0_2, %c0_3, %c0_4] : memref<1x32x16xf32, #tpu.memory_space<vmem>>, vector<1x32x16xf32>
    %3 = vector.shape_cast %2 : vector<1x32x16xf32> to vector<32x16xf32>
    %c0_5 = arith.constant 0 : index
    %c0_6 = arith.constant 0 : index
    %c0_7 = arith.constant 0 : index
    %4 = vector.load %arg3[%c0_5, %c0_6, %c0_7] : memref<1x16x32xf32, #tpu.memory_space<vmem>>, vector<1x16x32xf32>
    %5 = vector.shape_cast %4 : vector<1x16x32xf32> to vector<16x32xf32>
    %c0_8 = arith.constant 0 : index
    %c0_9 = arith.constant 0 : index
    %c0_10 = arith.constant 0 : index
    %6 = vector.load %arg4[%c0_8, %c0_9, %c0_10] : memref<1x1x16xf32, #tpu.memory_space<vmem>>, vector<1x1x16xf32>
    %7 = vector.shape_cast %6 : vector<1x1x16xf32> to vector<1x16xf32>
    %8 = vector.shape_cast %7 : vector<1x16xf32> to vector<1x16xf32>
    %9 = vector.broadcast %8 : vector<1x16xf32> to vector<8x16xf32>
    %c0_11 = arith.constant 0 : index
    %c0_12 = arith.constant 0 : index
    %10 = vector.load %arg5[%c0_11, %c0_12] : memref<32x32xf32, #tpu.memory_space<vmem>>, vector<32x32xf32>
    %cst = arith.constant dense<0.000000e+00> : vector<8x32xf32>
    %11 = tpu.matmul %1, %10, %cst {dimension_numbers = #tpu.dot_dimension_numbers<[1], [0], [0], [1], [0, 0, 1, 1], [], []>} : vector<8x32xf32>, vector<32x32xf32>, vector<8x32xf32> -> vector<8x32xf32>
    %c0_13 = arith.constant 0 : index
    %c0_14 = arith.constant 0 : index
    %12 = vector.load %arg9[%c0_13, %c0_14] : memref<1x32xf32, #tpu.memory_space<vmem>>, vector<1x32xf32>
    %13 = vector.broadcast %12 : vector<1x32xf32> to vector<8x32xf32>
    %14 = arith.addf %11, %13 : vector<8x32xf32>
    %cst_15 = arith.constant 0.353553385 : f32
    %15 = vector.broadcast %cst_15 : f32 to vector<8x32xf32>
    %16 = arith.mulf %14, %15 : vector<8x32xf32>
    %c0_16 = arith.constant 0 : index
    %c0_17 = arith.constant 0 : index
    %17 = vector.load %arg6[%c0_16, %c0_17] : memref<32x32xf32, #tpu.memory_space<vmem>>, vector<32x32xf32>
    %cst_18 = arith.constant dense<0.000000e+00> : vector<32x16xf32>
    %18 = tpu.matmul %17, %3, %cst_18 {dimension_numbers = #tpu.dot_dimension_numbers<[1], [0], [0], [1], [0, 0, 1, 1], [], []>} : vector<32x32xf32>, vector<32x16xf32>, vector<32x16xf32> -> vector<32x16xf32>
    %c0_19 = arith.constant 0 : index
    %c0_20 = arith.constant 0 : index
    %19 = vector.load %arg10[%c0_19, %c0_20] : memref<32x1xf32, #tpu.memory_space<vmem>>, vector<32x1xf32>
    %20 = vector.broadcast %19 : vector<32x1xf32> to vector<32x16xf32>
    %21 = arith.addf %18, %20 : vector<32x16xf32>
    %c0_21 = arith.constant 0 : index
    %c0_22 = arith.constant 0 : index
    %22 = vector.load %arg7[%c0_21, %c0_22] : memref<32x32xf32, #tpu.memory_space<vmem>>, vector<32x32xf32>
    %cst_23 = arith.constant dense<0.000000e+00> : vector<16x32xf32>
    %23 = tpu.matmul %5, %22, %cst_23 {dimension_numbers = #tpu.dot_dimension_numbers<[1], [0], [0], [1], [0, 0, 1, 1], [], []>} : vector<16x32xf32>, vector<32x32xf32>, vector<16x32xf32> -> vector<16x32xf32>
    %c0_24 = arith.constant 0 : index
    %c0_25 = arith.constant 0 : index
    %24 = vector.load %arg11[%c0_24, %c0_25] : memref<1x32xf32, #tpu.memory_space<vmem>>, vector<1x32xf32>
    %25 = vector.broadcast %24 : vector<1x32xf32> to vector<16x32xf32>
    %26 = arith.addf %23, %25 : vector<16x32xf32>
    %cst_26 = arith.constant 0.000000e+00 : f32
    %27 = vector.broadcast %cst_26 : f32 to vector<8x16xf32>
    %28 = vector.extract_strided_slice %16 {offsets = [0, 0], sizes = [8, 8], strides = [1, 1]} : vector<8x32xf32> to vector<8x8xf32>
    %29 = vector.extract_strided_slice %21 {offsets = [0, 0], sizes = [8, 16], strides = [1, 1]} : vector<32x16xf32> to vector<8x16xf32>
    %cst_27 = arith.constant dense<0.000000e+00> : vector<8x16xf32>
    %30 = tpu.matmul %28, %29, %cst_27 {dimension_numbers = #tpu.dot_dimension_numbers<[1], [0], [0], [1], [0, 0, 1, 1], [], []>} : vector<8x8xf32>, vector<8x16xf32>, vector<8x16xf32> -> vector<8x16xf32>
    %31 = arith.addf %30, %9 : vector<8x16xf32>
    %cst_28 = arith.constant dense<0xFF800000> : vector<8xf32>
    %32 = vector.multi_reduction <maximumf>, %31, %cst_28 [1] : vector<8x16xf32> to vector<8xf32>
    %33 = vector.shape_cast %32 : vector<8xf32> to vector<8x1xf32>
    %34 = vector.broadcast %33 : vector<8x1xf32> to vector<8x16xf32>
    %35 = arith.subf %31, %34 : vector<8x16xf32>
    %36 = math.exp %35 : vector<8x16xf32>
    %cst_29 = arith.constant dense<0.000000e+00> : vector<8xf32>
    %37 = vector.multi_reduction <add>, %36, %cst_29 [1] : vector<8x16xf32> to vector<8xf32>
    %38 = vector.shape_cast %37 : vector<8xf32> to vector<8x1xf32>
    %39 = tpu.reciprocal %38 : vector<8x1xf32> -> vector<8x1xf32>
    %40 = vector.broadcast %39 : vector<8x1xf32> to vector<8x16xf32>
    %41 = arith.mulf %36, %40 : vector<8x16xf32>
    %42 = vector.extract_strided_slice %26 {offsets = [0, 0], sizes = [16, 8], strides = [1, 1]} : vector<16x32xf32> to vector<16x8xf32>
    %cst_30 = arith.constant dense<0.000000e+00> : vector<8x8xf32>
    %43 = tpu.matmul %41, %42, %cst_30 {dimension_numbers = #tpu.dot_dimension_numbers<[1], [0], [0], [1], [0, 0, 1, 1], [], []>} : vector<8x16xf32>, vector<16x8xf32>, vector<8x8xf32> -> vector<8x8xf32>
    %44 = arith.addf %27, %41 : vector<8x16xf32>
    %45 = vector.extract_strided_slice %16 {offsets = [0, 8], sizes = [8, 8], strides = [1, 1]} : vector<8x32xf32> to vector<8x8xf32>
    %46 = vector.extract_strided_slice %21 {offsets = [8, 0], sizes = [8, 16], strides = [1, 1]} : vector<32x16xf32> to vector<8x16xf32>
    %cst_31 = arith.constant dense<0.000000e+00> : vector<8x16xf32>
    %47 = tpu.matmul %45, %46, %cst_31 {dimension_numbers = #tpu.dot_dimension_numbers<[1], [0], [0], [1], [0, 0, 1, 1], [], []>} : vector<8x8xf32>, vector<8x16xf32>, vector<8x16xf32> -> vector<8x16xf32>
    %48 = arith.addf %47, %9 : vector<8x16xf32>
    %cst_32 = arith.constant dense<0xFF800000> : vector<8xf32>
    %49 = vector.multi_reduction <maximumf>, %48, %cst_32 [1] : vector<8x16xf32> to vector<8xf32>
    %50 = vector.shape_cast %49 : vector<8xf32> to vector<8x1xf32>
    %51 = vector.broadcast %50 : vector<8x1xf32> to vector<8x16xf32>
    %52 = arith.subf %48, %51 : vector<8x16xf32>
    %53 = math.exp %52 : vector<8x16xf32>
    %cst_33 = arith.constant dense<0.000000e+00> : vector<8xf32>
    %54 = vector.multi_reduction <add>, %53, %cst_33 [1] : vector<8x16xf32> to vector<8xf32>
    %55 = vector.shape_cast %54 : vector<8xf32> to vector<8x1xf32>
    %56 = tpu.reciprocal %55 : vector<8x1xf32> -> vector<8x1xf32>
    %57 = vector.broadcast %56 : vector<8x1xf32> to vector<8x16xf32>
    %58 = arith.mulf %53, %57 : vector<8x16xf32>
    %59 = vector.extract_strided_slice %26 {offsets = [0, 8], sizes = [16, 8], strides = [1, 1]} : vector<16x32xf32> to vector<16x8xf32>
    %cst_34 = arith.constant dense<0.000000e+00> : vector<8x8xf32>
    %60 = tpu.matmul %58, %59, %cst_34 {dimension_numbers = #tpu.dot_dimension_numbers<[1], [0], [0], [1], [0, 0, 1, 1], [], []>} : vector<8x16xf32>, vector<16x8xf32>, vector<8x8xf32> -> vector<8x8xf32>
    %61 = arith.addf %44, %58 : vector<8x16xf32>
    %62 = vector.extract_strided_slice %16 {offsets = [0, 16], sizes = [8, 8], strides = [1, 1]} : vector<8x32xf32> to vector<8x8xf32>
    %63 = vector.extract_strided_slice %21 {offsets = [16, 0], sizes = [8, 16], strides = [1, 1]} : vector<32x16xf32> to vector<8x16xf32>
    %cst_35 = arith.constant dense<0.000000e+00> : vector<8x16xf32>
    %64 = tpu.matmul %62, %63, %cst_35 {dimension_numbers = #tpu.dot_dimension_numbers<[1], [0], [0], [1], [0, 0, 1, 1], [], []>} : vector<8x8xf32>, vector<8x16xf32>, vector<8x16xf32> -> vector<8x16xf32>
    %65 = arith.addf %64, %9 : vector<8x16xf32>
    %cst_36 = arith.constant dense<0xFF800000> : vector<8xf32>
    %66 = vector.multi_reduction <maximumf>, %65, %cst_36 [1] : vector<8x16xf32> to vector<8xf32>
    %67 = vector.shape_cast %66 : vector<8xf32> to vector<8x1xf32>
    %68 = vector.broadcast %67 : vector<8x1xf32> to vector<8x16xf32>
    %69 = arith.subf %65, %68 : vector<8x16xf32>
    %70 = math.exp %69 : vector<8x16xf32>
    %cst_37 = arith.constant dense<0.000000e+00> : vector<8xf32>
    %71 = vector.multi_reduction <add>, %70, %cst_37 [1] : vector<8x16xf32> to vector<8xf32>
    %72 = vector.shape_cast %71 : vector<8xf32> to vector<8x1xf32>
    %73 = tpu.reciprocal %72 : vector<8x1xf32> -> vector<8x1xf32>
    %74 = vector.broadcast %73 : vector<8x1xf32> to vector<8x16xf32>
    %75 = arith.mulf %70, %74 : vector<8x16xf32>
    %76 = vector.extract_strided_slice %26 {offsets = [0, 16], sizes = [16, 8], strides = [1, 1]} : vector<16x32xf32> to vector<16x8xf32>
    %cst_38 = arith.constant dense<0.000000e+00> : vector<8x8xf32>
    %77 = tpu.matmul %75, %76, %cst_38 {dimension_numbers = #tpu.dot_dimension_numbers<[1], [0], [0], [1], [0, 0, 1, 1], [], []>} : vector<8x16xf32>, vector<16x8xf32>, vector<8x8xf32> -> vector<8x8xf32>
    %78 = arith.addf %61, %75 : vector<8x16xf32>
    %79 = vector.extract_strided_slice %16 {offsets = [0, 24], sizes = [8, 8], strides = [1, 1]} : vector<8x32xf32> to vector<8x8xf32>
    %80 = vector.extract_strided_slice %21 {offsets = [24, 0], sizes = [8, 16], strides = [1, 1]} : vector<32x16xf32> to vector<8x16xf32>
    %cst_39 = arith.constant dense<0.000000e+00> : vector<8x16xf32>
    %81 = tpu.matmul %79, %80, %cst_39 {dimension_numbers = #tpu.dot_dimension_numbers<[1], [0], [0], [1], [0, 0, 1, 1], [], []>} : vector<8x8xf32>, vector<8x16xf32>, vector<8x16xf32> -> vector<8x16xf32>
    %82 = arith.addf %81, %9 : vector<8x16xf32>
    %cst_40 = arith.constant dense<0xFF800000> : vector<8xf32>
    %83 = vector.multi_reduction <maximumf>, %82, %cst_40 [1] : vector<8x16xf32> to vector<8xf32>
    %84 = vector.shape_cast %83 : vector<8xf32> to vector<8x1xf32>
    %85 = vector.broadcast %84 : vector<8x1xf32> to vector<8x16xf32>
    %86 = arith.subf %82, %85 : vector<8x16xf32>
    %87 = math.exp %86 : vector<8x16xf32>
    %cst_41 = arith.constant dense<0.000000e+00> : vector<8xf32>
    %88 = vector.multi_reduction <add>, %87, %cst_41 [1] : vector<8x16xf32> to vector<8xf32>
    %89 = vector.shape_cast %88 : vector<8xf32> to vector<8x1xf32>
    %90 = tpu.reciprocal %89 : vector<8x1xf32> -> vector<8x1xf32>
    %91 = vector.broadcast %90 : vector<8x1xf32> to vector<8x16xf32>
    %92 = arith.mulf %87, %91 : vector<8x16xf32>
    %93 = vector.extract_strided_slice %26 {offsets = [0, 24], sizes = [16, 8], strides = [1, 1]} : vector<16x32xf32> to vector<16x8xf32>
    %cst_42 = arith.constant dense<0.000000e+00> : vector<8x8xf32>
    %94 = tpu.matmul %92, %93, %cst_42 {dimension_numbers = #tpu.dot_dimension_numbers<[1], [0], [0], [1], [0, 0, 1, 1], [], []>} : vector<8x16xf32>, vector<16x8xf32>, vector<8x8xf32> -> vector<8x8xf32>
    %95 = arith.addf %78, %92 : vector<8x16xf32>
    %96 = tpu.concatenate %43, %60, %77, %94 in 1 : vector<8x8xf32>, vector<8x8xf32>, vector<8x8xf32>, vector<8x8xf32> -> vector<8x32xf32>
    %c0_43 = arith.constant 0 : index
    %c0_44 = arith.constant 0 : index
    %97 = vector.load %arg8[%c0_43, %c0_44] : memref<32x32xf32, #tpu.memory_space<vmem>>, vector<32x32xf32>
    %cst_45 = arith.constant dense<0.000000e+00> : vector<8x32xf32>
    %98 = tpu.matmul %96, %97, %cst_45 {dimension_numbers = #tpu.dot_dimension_numbers<[1], [0], [0], [1], [0, 0, 1, 1], [], []>} : vector<8x32xf32>, vector<32x32xf32>, vector<8x32xf32> -> vector<8x32xf32>
    %c0_46 = arith.constant 0 : index
    %c0_47 = arith.constant 0 : index
    %99 = vector.load %arg12[%c0_46, %c0_47] : memref<1x32xf32, #tpu.memory_space<vmem>>, vector<1x32xf32>
    %100 = vector.broadcast %99 : vector<1x32xf32> to vector<8x32xf32>
    %101 = arith.addf %98, %100 : vector<8x32xf32>
    %c0_48 = arith.constant 0 : index
    %c0_49 = arith.constant 0 : index
    %c0_50 = arith.constant 0 : index
    %102 = vector.load %arg13[%c0_48, %c0_49, %c0_50] : memref<1x8x32xf32, #tpu.memory_space<vmem>>, vector<1x8x32xf32>
    %103 = vector.shape_cast %102 : vector<1x8x32xf32> to vector<8x32xf32>
    %104 = vector.shape_cast %101 : vector<8x32xf32> to vector<1x8x32xf32>
    tpu.vector_store %arg13[%c0_48, %c0_49, %c0_50], %104 {strides = array<i32>} : memref<1x8x32xf32, #tpu.memory_space<vmem>>, vector<1x8x32xf32>,
    %cst_51 = arith.constant 2.500000e-01 : f32
    %105 = vector.broadcast %cst_51 : f32 to vector<8x16xf32>
    %106 = arith.mulf %95, %105 : vector<8x16xf32>
    %c0_52 = arith.constant 0 : index
    %c0_53 = arith.constant 0 : index
    %c0_54 = arith.constant 0 : index
    %107 = vector.load %arg14[%c0_52, %c0_53, %c0_54] : memref<1x8x16xf32, #tpu.memory_space<vmem>>, vector<1x8x16xf32>
    %108 = vector.shape_cast %107 : vector<1x8x16xf32> to vector<8x16xf32>
    %109 = vector.shape_cast %106 : vector<8x16xf32> to vector<1x8x16xf32>
    tpu.vector_store %arg14[%c0_52, %c0_53, %c0_54], %109 {strides = array<i32>} : memref<1x8x16xf32, #tpu.memory_space<vmem>>, vector<1x8x16xf32>,
    return
  }
  func.func @transform_0(%arg0: i32) -> (i32, i32, i32) {
    %c0_i32 = arith.constant 0 : i32
    %c0_i32_0 = arith.constant 0 : i32
    %c0_i32_1 = arith.constant 0 : i32
    return %arg0, %c0_i32, %c0_i32_0 : i32, i32, i32
  }
  func.func @transform_1(%arg0: i32) -> (i32, i32, i32) {
    %c0_i32 = arith.constant 0 : i32
    %c0_i32_0 = arith.constant 0 : i32
    %c0_i32_1 = arith.constant 0 : i32
    return %arg0, %c0_i32, %c0_i32_0 : i32, i32, i32
  }
  func.func @transform_2(%arg0: i32) -> (i32, i32, i32) {
    %c0_i32 = arith.constant 0 : i32
    %c0_i32_0 = arith.constant 0 : i32
    %c0_i32_1 = arith.constant 0 : i32
    return %arg0, %c0_i32, %c0_i32_0 : i32, i32, i32
  }
  func.func @transform_3(%arg0: i32) -> (i32, i32, i32) {
    %c0_i32 = arith.constant 0 : i32
    %c0_i32_0 = arith.constant 0 : i32
    %c0_i32_1 = arith.constant 0 : i32
    return %arg0, %c0_i32, %c0_i32_0 : i32, i32, i32
  }
  func.func @transform_4(%arg0: i32) -> (i32, i32) {
    %c0_i32 = arith.constant 0 : i32
    %c0_i32_0 = arith.constant 0 : i32
    %c0_i32_1 = arith.constant 0 : i32
    return %c0_i32, %c0_i32_0 : i32, i32
  }
  func.func @transform_5(%arg0: i32) -> (i32, i32) {
    %c0_i32 = arith.constant 0 : i32
    %c0_i32_0 = arith.constant 0 : i32
    %c0_i32_1 = arith.constant 0 : i32
    return %c0_i32, %c0_i32_0 : i32, i32
  }
  func.func @transform_6(%arg0: i32) -> (i32, i32) {
    %c0_i32 = arith.constant 0 : i32
    %c0_i32_0 = arith.constant 0 : i32
    %c0_i32_1 = arith.constant 0 : i32
    return %c0_i32, %c0_i32_0 : i32, i32
  }
  func.func @transform_7(%arg0: i32) -> (i32, i32) {
    %c0_i32 = arith.constant 0 : i32
    %c0_i32_0 = arith.constant 0 : i32
    %c0_i32_1 = arith.constant 0 : i32
    return %c0_i32, %c0_i32_0 : i32, i32
  }
  func.func @transform_8(%arg0: i32) -> (i32, i32) {
    %c0_i32 = arith.constant 0 : i32
    %c0_i32_0 = arith.constant 0 : i32
    %c0_i32_1 = arith.constant 0 : i32
    return %c0_i32, %c0_i32_0 : i32, i32
  }
  func.func @transform_9(%arg0: i32) -> (i32, i32) {
    %c0_i32 = arith.constant 0 : i32
    %c0_i32_0 = arith.constant 0 : i32
    %c0_i32_1 = arith.constant 0 : i32
    return %c0_i32, %c0_i32_0 : i32, i32
  }
  func.func @transform_10(%arg0: i32) -> (i32, i32) {
    %c0_i32 = arith.constant 0 : i32
    %c0_i32_0 = arith.constant 0 : i32
    %c0_i32_1 = arith.constant 0 : i32
    return %c0_i32, %c0_i32_0 : i32, i32
  }
  func.func @transform_11(%arg0: i32) -> (i32, i32) {
    %c0_i32 = arith.constant 0 : i32
    %c0_i32_0 = arith.constant 0 : i32
    %c0_i32_1 = arith.constant 0 : i32
    return %c0_i32, %c0_i32_0 : i32, i32
  }
  func.func @transform_12(%arg0: i32) -> (i32, i32, i32) {
    %c0_i32 = arith.constant 0 : i32
    %c0_i32_0 = arith.constant 0 : i32
    %c0_i32_1 = arith.constant 0 : i32
    return %arg0, %c0_i32, %c0_i32_0 : i32, i32, i32
  }
  func.func @transform_13(%arg0: i32) -> (i32, i32, i32) {
    %c0_i32 = arith.constant 0 : i32
    %c0_i32_0 = arith.constant 0 : i32
    %c0_i32_1 = arith.constant 0 : i32
    return %arg0, %c0_i32, %c0_i32_0 : i32, i32, i32
  }
}

</mosaic_0001>

<llo_original>
// kernel: flat_han_attention.1
$region0: #{flat_han_attention.1}
  #allocation0 [shape = 'u32[]', space=smem, size = 0x4, offset = 0x4, fixed_abs, tag = 'smem constant byte address 0x4 - core index']
  #allocation1 [shape = 'u32[144,128]{1,0:T(1,128)}', space=vmem, size = 0x12000, scoped, tag = 'internal scratch']
  %s0 = inlined_call_operand.vmem [shape: f32[2,8,32], index: 0, kind: input, shape index: {}]
  %s1 = inlined_call_operand.vmem [shape: f32[2,32,16], index: 1, kind: input, shape index: {}]
  %s2 = inlined_call_operand.vmem [shape: f32[2,16,32], index: 2, kind: input, shape index: {}]
  %s3 = inlined_call_operand.vmem [shape: f32[2,1,16], index: 3, kind: input, shape index: {}]
  %s4 = inlined_call_operand.vmem [shape: f32[32,32], index: 4, kind: input, shape index: {}]
  %s5 = inlined_call_operand.vmem [shape: f32[32,32], index: 5, kind: input, shape index: {}]
  %s6 = inlined_call_operand.vmem [shape: f32[32,32], index: 6, kind: input, shape index: {}]
  %s7 = inlined_call_operand.vmem [shape: f32[32,32], index: 7, kind: input, shape index: {}]
  %s8 = inlined_call_operand.vmem [shape: f32[1,32], index: 8, kind: input, shape index: {}]
  %s9 = inlined_call_operand.vmem [shape: f32[32,1], index: 9, kind: input, shape index: {}]
  %s10 = inlined_call_operand.vmem [shape: f32[1,32], index: 10, kind: input, shape index: {}]
  %s11 = inlined_call_operand.vmem [shape: f32[1,32], index: 11, kind: input, shape index: {}]
  %s12 = inlined_call_operand.vmem [shape: f32[2,8,32], index: 12, kind: output, shape index: {0}]
  %s13 = inlined_call_operand.hbm [shape: f32[2,8,16], index: 13, kind: output, shape index: {1}]
  %14 = xla_tuple %s12, %s13
  %s15 = sld [smem:[#allocation0]]
  $region89: #{flat_han_attention.1} parent=0
    _
  %s17 = ssub.s32 1, %s15
  %s18 = scalar_select 0, %s17, %s15
  $region1: #{flat_han_attention.1} parent=0
    #allocation2 [shape = 'u8[8192]{0}', space=vmem, size = 0x2000, scoped, tag = 'output window, operand 1']
    #allocation3 [shape = 's32[2]{0}', space=sflag, size = 0x8, scoped, tag = 'scoped memory for flat_han_attention.1']
    %19 = vsyncpa [#allocation3], 0
    %s20 = scalar_lea.sflag [#allocation3], 1
    %21 = vsyncpa %s20, 0
    loop: start=0, step=1, limit=4
    $region2: #{flat_han_attention.1} parent=1 // loop_pre_header
      _
    $region3: #{flat_han_attention.1} parent=1 // loop_header
      %s23 = sphi 0, %s27
      %p24 = scmp.ge.s32.totalorder %s23, 4
      %s33 = sphi 0, %s35
      %s36 = sphi 0, %s33
      %s37 = sphi 0, %s36
      %s53 = sphi 0, %s37
      %s59 = sphi 0, %s61
      %s62 = sphi 0, %s59
      %s63 = sphi 0, %s62
      %s79 = sphi 0, %s63
      %s85 = sphi 0, %s87
      %s88 = sphi 0, %s85
      %s89 = sphi 0, %s88
      %s105 = sphi 0, %s89
      %s111 = sphi 0, %s113
      %s114 = sphi 0, %s111
      %s115 = sphi 0, %s114
      %s131 = sphi 0, %s115
      %s135 = sphi 0, %s135
      %s137 = sphi 0, %s135
      %s138 = sphi 0, %s137
      %s152 = sphi 0, %s138
      %s156 = sphi 0, %s156
      %s158 = sphi 0, %s156
      %s159 = sphi 0, %s158
      %s173 = sphi 0, %s159
      %s177 = sphi 0, %s177
      %s179 = sphi 0, %s177
      %s180 = sphi 0, %s179
      %s194 = sphi 0, %s180
      %s198 = sphi 0, %s198
      %s200 = sphi 0, %s198
      %s201 = sphi 0, %s200
      %s215 = sphi 0, %s201
      %s219 = sphi 0, %s219
      %s221 = sphi 0, %s219
      %s222 = sphi 0, %s221
      %s236 = sphi 0, %s222
      %s240 = sphi 0, %s240
      %s242 = sphi 0, %s240
      %s243 = sphi 0, %s242
      %s257 = sphi 0, %s243
      %s261 = sphi 0, %s261
      %s263 = sphi 0, %s261
      %s264 = sphi 0, %s263
      %s278 = sphi 0, %s264
      %s282 = sphi 0, %s282
      %s284 = sphi 0, %s282
      %s285 = sphi 0, %s284
      %s299 = sphi 0, %s285
      %s305 = sphi 0, %s307
      %s308 = sphi 0, %s305
      %s309 = sphi 0, %s308
      %s325 = sphi 0, %s309
      %s331 = sphi 0, %s333
      %s334 = sphi 0, %s331
      %s335 = sphi 0, %s334
      %s351 = sphi 0, %s335
    $region4: #{flat_han_attention.1} parent=1 // loop_header_branch
      %26 = sbr.rel (%p24) target = $region8
    $region5: #{flat_han_attention.1} parent=1 // loop_body
      %s28 = ssub.s32 %s23, 1
      %s29 = ssub.s32 %s23, 2
      %s30 = sadd.s32 %s23, 1
      %s31 = ssub.s32 %s23, %s30
      %p32 = scmp.eq.s32.totalorder %s31, 0
      %s34 = sadd.s32 %s33, 1
      %s35 = scalar_select %p32, %s33, %s34
      %p38 = pneg %p32
      %p39 = scmp.eq.s32.totalorder %s23, 1
      %p40 = por %p38, %p39
      %p41 = scmp.ne.s32.totalorder %s33, %s36
      %p42 = scmp.eq.s32.totalorder %s23, 0
      %p43 = por %p41, %p42
      %p44 = scmp.ne.s32.totalorder %s33, %s36
      %p45 = scmp.eq.s32.totalorder %s28, 1
      %p46 = por %p44, %p45
      %p47 = scmp.ne.s32.totalorder %s36, %s37
      %p48 = scmp.eq.s32.totalorder %s28, 0
      %p49 = por %p47, %p48
      %p50 = scmp.ne.s32.totalorder %s36, %s37
      %p51 = scmp.eq.s32.totalorder %s29, 1
      %p52 = por %p50, %p51
      %p54 = scmp.ne.s32.totalorder %s37, %s53
      %p55 = scmp.eq.s32.totalorder %s29, 0
      %p56 = por %p54, %p55
      %s57 = ssub.s32 %s23, %s30
      %p58 = scmp.eq.s32.totalorder %s57, 0
      %s60 = sadd.s32 %s59, 1
      %s61 = scalar_select %p58, %s59, %s60
      %p64 = pneg %p58
      %p65 = scmp.eq.s32.totalorder %s23, 1
      %p66 = por %p64, %p65
      %p67 = scmp.ne.s32.totalorder %s59, %s62
      %p68 = scmp.eq.s32.totalorder %s23, 0
      %p69 = por %p67, %p68
      %p70 = scmp.ne.s32.totalorder %s59, %s62
      %p71 = scmp.eq.s32.totalorder %s28, 1
      %p72 = por %p70, %p71
      %p73 = scmp.ne.s32.totalorder %s62, %s63
      %p74 = scmp.eq.s32.totalorder %s28, 0
      %p75 = por %p73, %p74
      %p76 = scmp.ne.s32.totalorder %s62, %s63
      %p77 = scmp.eq.s32.totalorder %s29, 1
      %p78 = por %p76, %p77
      %p80 = scmp.ne.s32.totalorder %s63, %s79
      %p81 = scmp.eq.s32.totalorder %s29, 0
      %p82 = por %p80, %p81
      %s83 = ssub.s32 %s23, %s30
      %p84 = scmp.eq.s32.totalorder %s83, 0
      %s86 = sadd.s32 %s85, 1
      %s87 = scalar_select %p84, %s85, %s86
      %p90 = pneg %p84
      %p91 = scmp.eq.s32.totalorder %s23, 1
      %p92 = por %p90, %p91
      %p93 = scmp.ne.s32.totalorder %s85, %s88
      %p94 = scmp.eq.s32.totalorder %s23, 0
      %p95 = por %p93, %p94
      %p96 = scmp.ne.s32.totalorder %s85, %s88
      %p97 = scmp.eq.s32.totalorder %s28, 1
      %p98 = por %p96, %p97
      %p99 = scmp.ne.s32.totalorder %s88, %s89
      %p100 = scmp.eq.s32.totalorder %s28, 0
      %p101 = por %p99, %p100
      %p102 = scmp.ne.s32.totalorder %s88, %s89
      %p103 = scmp.eq.s32.totalorder %s29, 1
      %p104 = por %p102, %p103
      %p106 = scmp.ne.s32.totalorder %s89, %s105
      %p107 = scmp.eq.s32.totalorder %s29, 0
      %p108 = por %p106, %p107
      %s109 = ssub.s32 %s23, %s30
      %p110 = scmp.eq.s32.totalorder %s109, 0
      %s112 = sadd.s32 %s111, 1
      %s113 = scalar_select %p110, %s111, %s112
      %p116 = pneg %p110
      %p117 = scmp.eq.s32.totalorder %s23, 1
      %p118 = por %p116, %p117
      %p119 = scmp.ne.s32.totalorder %s111, %s114
      %p120 = scmp.eq.s32.totalorder %s23, 0
      %p121 = por %p119, %p120
      %p122 = scmp.ne.s32.totalorder %s111, %s114
      %p123 = scmp.eq.s32.totalorder %s28, 1
      %p124 = por %p122, %p123
      %p125 = scmp.ne.s32.totalorder %s114, %s115
      %p126 = scmp.eq.s32.totalorder %s28, 0
      %p127 = por %p125, %p126
      %p128 = scmp.ne.s32.totalorder %s114, %s115
      %p129 = scmp.eq.s32.totalorder %s29, 1
      %p130 = por %p128, %p129
      %p132 = scmp.ne.s32.totalorder %s115, %s131
      %p133 = scmp.eq.s32.totalorder %s29, 0
      %p134 = por %p132, %p133
      %s136 = sadd.s32 %s135, 1
      %p139 = scmp.eq.s32.totalorder %s23, 1
      %p140 = scmp.ne.s32.totalorder %s135, %s137
      %p141 = scmp.eq.s32.totalorder %s23, 0
      %p142 = por %p140, %p141
      %p143 = scmp.ne.s32.totalorder %s135, %s137
      %p144 = scmp.eq.s32.totalorder %s28, 1
      %p145 = por %p143, %p144
      %p146 = scmp.ne.s32.totalorder %s137, %s138
      %p147 = scmp.eq.s32.totalorder %s28, 0
      %p148 = por %p146, %p147
      %p149 = scmp.ne.s32.totalorder %s137, %s138
      %p150 = scmp.eq.s32.totalorder %s29, 1
      %p151 = por %p149, %p150
      %p153 = scmp.ne.s32.totalorder %s138, %s152
      %p154 = scmp.eq.s32.totalorder %s29, 0
      %p155 = por %p153, %p154
      %s157 = sadd.s32 %s156, 1
      %p160 = scmp.eq.s32.totalorder %s23, 1
      %p161 = scmp.ne.s32.totalorder %s156, %s158
      %p162 = scmp.eq.s32.totalorder %s23, 0
      %p163 = por %p161, %p162
      %p164 = scmp.ne.s32.totalorder %s156, %s158
      %p165 = scmp.eq.s32.totalorder %s28, 1
      %p166 = por %p164, %p165
      %p167 = scmp.ne.s32.totalorder %s158, %s159
      %p168 = scmp.eq.s32.totalorder %s28, 0
      %p169 = por %p167, %p168
      %p170 = scmp.ne.s32.totalorder %s158, %s159
      %p171 = scmp.eq.s32.totalorder %s29, 1
      %p172 = por %p170, %p171
      %p174 = scmp.ne.s32.totalorder %s159, %s173
      %p175 = scmp.eq.s32.totalorder %s29, 0
      %p176 = por %p174, %p175
      %s178 = sadd.s32 %s177, 1
      %p181 = scmp.eq.s32.totalorder %s23, 1
      %p182 = scmp.ne.s32.totalorder %s177, %s179
      %p183 = scmp.eq.s32.totalorder %s23, 0
      %p184 = por %p182, %p183
      %p185 = scmp.ne.s32.totalorder %s177, %s179
      %p186 = scmp.eq.s32.totalorder %s28, 1
      %p187 = por %p185, %p186
      %p188 = scmp.ne.s32.totalorder %s179, %s180
      %p189 = scmp.eq.s32.totalorder %s28, 0
      %p190 = por %p188, %p189
      %p191 = scmp.ne.s32.totalorder %s179, %s180
      %p192 = scmp.eq.s32.totalorder %s29, 1
      %p193 = por %p191, %p192
      %p195 = scmp.ne.s32.totalorder %s180, %s194
      %p196 = scmp.eq.s32.totalorder %s29, 0
      %p197 = por %p195, %p196
      %s199 = sadd.s32 %s198, 1
      %p202 = scmp.eq.s32.totalorder %s23, 1
      %p203 = scmp.ne.s32.totalorder %s198, %s200
      %p204 = scmp.eq.s32.totalorder %s23, 0
      %p205 = por %p203, %p204
      %p206 = scmp.ne.s32.totalorder %s198, %s200
      %p207 = scmp.eq.s32.totalorder %s28, 1
      %p208 = por %p206, %p207
      %p209 = scmp.ne.s32.totalorder %s200, %s201
      %p210 = scmp.eq.s32.totalorder %s28, 0
      %p211 = por %p209, %p210
      %p212 = scmp.ne.s32.totalorder %s200, %s201
      %p213 = scmp.eq.s32.totalorder %s29, 1
      %p214 = por %p212, %p213
      %p216 = scmp.ne.s32.totalorder %s201, %s215
      %p217 = scmp.eq.s32.totalorder %s29, 0
      %p218 = por %p216, %p217
      %s220 = sadd.s32 %s219, 1
      %p223 = scmp.eq.s32.totalorder %s23, 1
      %p224 = scmp.ne.s32.totalorder %s219, %s221
      %p225 = scmp.eq.s32.totalorder %s23, 0
      %p226 = por %p224, %p225
      %p227 = scmp.ne.s32.totalorder %s219, %s221
      %p228 = scmp.eq.s32.totalorder %s28, 1
      %p229 = por %p227, %p228
      %p230 = scmp.ne.s32.totalorder %s221, %s222
      %p231 = scmp.eq.s32.totalorder %s28, 0
      %p232 = por %p230, %p231
      %p233 = scmp.ne.s32.totalorder %s221, %s222
      %p234 = scmp.eq.s32.totalorder %s29, 1
      %p235 = por %p233, %p234
      %p237 = scmp.ne.s32.totalorder %s222, %s236
      %p238 = scmp.eq.s32.totalorder %s29, 0
      %p239 = por %p237, %p238
      %s241 = sadd.s32 %s240, 1
      %p244 = scmp.eq.s32.totalorder %s23, 1
      %p245 = scmp.ne.s32.totalorder %s240, %s242
      %p246 = scmp.eq.s32.totalorder %s23, 0
      %p247 = por %p245, %p246
      %p248 = scmp.ne.s32.totalorder %s240, %s242
      %p249 = scmp.eq.s32.totalorder %s28, 1
      %p250 = por %p248, %p249
      %p251 = scmp.ne.s32.totalorder %s242, %s243
      %p252 = scmp.eq.s32.totalorder %s28, 0
      %p253 = por %p251, %p252
      %p254 = scmp.ne.s32.totalorder %s242, %s243
      %p255 = scmp.eq.s32.totalorder %s29, 1
      %p256 = por %p254, %p255
      %p258 = scmp.ne.s32.totalorder %s243, %s257
      %p259 = scmp.eq.s32.totalorder %s29, 0
      %p260 = por %p258, %p259
      %s262 = sadd.s32 %s261, 1
      %p265 = scmp.eq.s32.totalorder %s23, 1
      %p266 = scmp.ne.s32.totalorder %s261, %s263
      %p267 = scmp.eq.s32.totalorder %s23, 0
      %p268 = por %p266, %p267
      %p269 = scmp.ne.s32.totalorder %s261, %s263
      %p270 = scmp.eq.s32.totalorder %s28, 1
      %p271 = por %p269, %p270
      %p272 = scmp.ne.s32.totalorder %s263, %s264
      %p273 = scmp.eq.s32.totalorder %s28, 0
      %p274 = por %p272, %p273
      %p275 = scmp.ne.s32.totalorder %s263, %s264
      %p276 = scmp.eq.s32.totalorder %s29, 1
      %p277 = por %p275, %p276
      %p279 = scmp.ne.s32.totalorder %s264, %s278
      %p280 = scmp.eq.s32.totalorder %s29, 0
      %p281 = por %p279, %p280
      %s283 = sadd.s32 %s282, 1
      %p286 = scmp.eq.s32.totalorder %s23, 1
      %p287 = scmp.ne.s32.totalorder %s282, %s284
      %p288 = scmp.eq.s32.totalorder %s23, 0
      %p289 = por %p287, %p288
      %p290 = scmp.ne.s32.totalorder %s282, %s284
      %p291 = scmp.eq.s32.totalorder %s28, 1
      %p292 = por %p290, %p291
      %p293 = scmp.ne.s32.totalorder %s284, %s285
      %p294 = scmp.eq.s32.totalorder %s28, 0
      %p295 = por %p293, %p294
      %p296 = scmp.ne.s32.totalorder %s284, %s285
      %p297 = scmp.eq.s32.totalorder %s29, 1
      %p298 = por %p296, %p297
      %p300 = scmp.ne.s32.totalorder %s285, %s299
      %p301 = scmp.eq.s32.totalorder %s29, 0
      %p302 = por %p300, %p301
      %s303 = ssub.s32 %s23, %s30
      %p304 = scmp.eq.s32.totalorder %s303, 0
      %s306 = sadd.s32 %s305, 1
      %s307 = scalar_select %p304, %s305, %s306
      %p310 = pneg %p304
      %p311 = scmp.eq.s32.totalorder %s23, 1
      %p312 = por %p310, %p311
      %p313 = scmp.ne.s32.totalorder %s305, %s308
      %p314 = scmp.eq.s32.totalorder %s23, 0
      %p315 = por %p313, %p314
      %p316 = scmp.ne.s32.totalorder %s305, %s308
      %p317 = scmp.eq.s32.totalorder %s28, 1
      %p318 = por %p316, %p317
      %p319 = scmp.ne.s32.totalorder %s308, %s309
      %p320 = scmp.eq.s32.totalorder %s28, 0
      %p321 = por %p319, %p320
      %p322 = scmp.ne.s32.totalorder %s308, %s309
      %p323 = scmp.eq.s32.totalorder %s29, 1
      %p324 = por %p322, %p323
      %p326 = scmp.ne.s32.totalorder %s309, %s325
      %p327 = scmp.eq.s32.totalorder %s29, 0
      %p328 = por %p326, %p327
      %s329 = ssub.s32 %s23, %s30
      %p330 = scmp.eq.s32.totalorder %s329, 0
      %s332 = sadd.s32 %s331, 1
      %s333 = scalar_select %p330, %s331, %s332
      %p336 = pneg %p330
      %p337 = scmp.eq.s32.totalorder %s23, 1
      %p338 = por %p336, %p337
      %p339 = scmp.ne.s32.totalorder %s331, %s334
      %p340 = scmp.eq.s32.totalorder %s23, 0
      %p341 = por %p339, %p340
      %p342 = scmp.ne.s32.totalorder %s331, %s334
      %p343 = scmp.eq.s32.totalorder %s28, 1
      %p344 = por %p342, %p343
      %p345 = scmp.ne.s32.totalorder %s334, %s335
      %p346 = scmp.eq.s32.totalorder %s28, 0
      %p347 = por %p345, %p346
      %p348 = scmp.ne.s32.totalorder %s334, %s335
      %p349 = scmp.eq.s32.totalorder %s29, 1
      %p350 = por %p348, %p349
      %p352 = scmp.ne.s32.totalorder %s335, %s351
      %p353 = scmp.eq.s32.totalorder %s29, 0
      %p354 = por %p352, %p353
      %p355 = scmp.le.s32.totalorder 1, %s23
      %p356 = scmp.lt.s32.totalorder %s23, 3
      %p357 = pnand %p355, %p356
      %p358 = pneg %p357
      // Predicated region
      $region9: #{flat_han_attention.1} parent=5 // pred_check
        _
      $region10: #{flat_han_attention.1} parent=5 // pred_check_branch
        %360 = sbr.rel (%p357) target = $region12
      $region11: #{flat_han_attention.1} parent=5 // pred_region
        %s361 = ssub.s32 %s23, 1
        // Predicated region
        $region13: #{flat_han_attention.1} parent=11 // pred_check
          %p362 = pneg %p148
        $region14: #{flat_han_attention.1} parent=11 // pred_check_branch
          %364 = sbr.rel (%p362) target = $region16
        $region15: #{flat_han_attention.1} parent=11 // pred_region
          _
        $region16: #{flat_han_attention.1} parent=11 // pred_fallthru
          _
        // Predicated region
        $region17: #{flat_han_attention.1} parent=11 // pred_check
          %p365 = pneg %p169
        $region18: #{flat_han_attention.1} parent=11 // pred_check_branch
          %367 = sbr.rel (%p365) target = $region20
        $region19: #{flat_han_attention.1} parent=11 // pred_region
          _
        $region20: #{flat_han_attention.1} parent=11 // pred_fallthru
          _
        // Predicated region
        $region21: #{flat_han_attention.1} parent=11 // pred_check
          %p368 = pneg %p190
        $region22: #{flat_han_attention.1} parent=11 // pred_check_branch
          %370 = sbr.rel (%p368) target = $region24
        $region23: #{flat_han_attention.1} parent=11 // pred_region
          _
        $region24: #{flat_han_attention.1} parent=11 // pred_fallthru
          _
        // Predicated region
        $region25: #{flat_han_attention.1} parent=11 // pred_check
          %p371 = pneg %p211
        $region26: #{flat_han_attention.1} parent=11 // pred_check_branch
          %373 = sbr.rel (%p371) target = $region28
        $region27: #{flat_han_attention.1} parent=11 // pred_region
          _
        $region28: #{flat_han_attention.1} parent=11 // pred_fallthru
          _
        // Predicated region
        $region29: #{flat_han_attention.1} parent=11 // pred_check
          %p374 = pneg %p232
        $region30: #{flat_han_attention.1} parent=11 // pred_check_branch
          %376 = sbr.rel (%p374) target = $region32
        $region31: #{flat_han_attention.1} parent=11 // pred_region
          _
        $region32: #{flat_han_attention.1} parent=11 // pred_fallthru
          _
        // Predicated region
        $region33: #{flat_han_attention.1} parent=11 // pred_check
          %p377 = pneg %p253
        $region34: #{flat_han_attention.1} parent=11 // pred_check_branch
          %379 = sbr.rel (%p377) target = $region36
        $region35: #{flat_han_attention.1} parent=11 // pred_region
          _
        $region36: #{flat_han_attention.1} parent=11 // pred_fallthru
          _
        // Predicated region
        $region37: #{flat_han_attention.1} parent=11 // pred_check
          %p380 = pneg %p274
        $region38: #{flat_han_attention.1} parent=11 // pred_check_branch
          %382 = sbr.rel (%p380) target = $region40
        $region39: #{flat_han_attention.1} parent=11 // pred_region
          _
        $region40: #{flat_han_attention.1} parent=11 // pred_fallthru
          _
        // Predicated region
        $region41: #{flat_han_attention.1} parent=11 // pred_check
          %p383 = pneg %p295
        $region42: #{flat_han_attention.1} parent=11 // pred_check_branch
          %385 = sbr.rel (%p383) target = $region44
        $region43: #{flat_han_attention.1} parent=11 // pred_region
          _
        $region44: #{flat_han_attention.1} parent=11 // pred_fallthru
          _
      $region12: #{flat_han_attention.1} parent=5 // pred_fallthru
        _
      %p386 = scmp.lt.s32.totalorder %s23, 2
      // Predicated region
      $region45: #{flat_han_attention.1} parent=5 // pred_check
        %p387 = pneg %p386
      $region46: #{flat_han_attention.1} parent=5 // pred_check_branch
        %389 = sbr.rel (%p387) target = $region48
      $region47: #{flat_han_attention.1} parent=5 // pred_region
        // Predicated region
        $region49: #{flat_han_attention.1} parent=47 // pred_check
          %p390 = pneg %p43
        $region50: #{flat_han_attention.1} parent=47 // pred_check_branch
          %392 = sbr.rel (%p390) target = $region52
        $region51: #{flat_han_attention.1} parent=47 // pred_region
          %p393 = scmp.lt.s32.totalorder %s23, 1
          %s394 = scalar_select %p393, %s23, 1
          %s395 = smul.addr %s394, 8
          %s396 = scalar_lea.vmem %s0, %s395
        $region52: #{flat_han_attention.1} parent=47 // pred_fallthru
          _
        // Predicated region
        $region53: #{flat_han_attention.1} parent=47 // pred_check
          %p397 = pneg %p69
        $region54: #{flat_han_attention.1} parent=47 // pred_check_branch
          %399 = sbr.rel (%p397) target = $region56
        $region55: #{flat_han_attention.1} parent=47 // pred_region
          %p400 = scmp.lt.s32.totalorder %s23, 1
          %s401 = scalar_select %p400, %s23, 1
          %s402 = smul.addr %s401, 4
          %s403 = smul.addr %s402, 8
          %s404 = scalar_lea.vmem %s1, %s403
        $region56: #{flat_han_attention.1} parent=47 // pred_fallthru
          _
        // Predicated region
        $region57: #{flat_han_attention.1} parent=47 // pred_check
          %p405 = pneg %p95
        $region58: #{flat_han_attention.1} parent=47 // pred_check_branch
          %407 = sbr.rel (%p405) target = $region60
        $region59: #{flat_han_attention.1} parent=47 // pred_region
          %p408 = scmp.lt.s32.totalorder %s23, 1
          %s409 = scalar_select %p408, %s23, 1
          %s410 = smul.addr %s409, 2
          %s411 = smul.addr %s410, 8
          %s412 = scalar_lea.vmem %s2, %s411
        $region60: #{flat_han_attention.1} parent=47 // pred_fallthru
          _
        // Predicated region
        $region61: #{flat_han_attention.1} parent=47 // pred_check
          %p413 = pneg %p121
        $region62: #{flat_han_attention.1} parent=47 // pred_check_branch
          %415 = sbr.rel (%p413) target = $region64
        $region63: #{flat_han_attention.1} parent=47 // pred_region
          %p416 = scmp.lt.s32.totalorder %s23, 1
          %s417 = scalar_select %p416, %s23, 1
          %s418 = scalar_lea.vmem %s3, %s417
        $region64: #{flat_han_attention.1} parent=47 // pred_fallthru
          _
      $region48: #{flat_han_attention.1} parent=5 // pred_fallthru
        _
      %p419 = scmp.le.s32.totalorder 1, %s23
      %p420 = scmp.lt.s32.totalorder %s23, 3
      %p421 = pnand %p419, %p420
      %p422 = pneg %p421
      // Predicated region
      $region65: #{flat_han_attention.1} parent=5 // pred_check
        _
      $region66: #{flat_han_attention.1} parent=5 // pred_check_branch
        %424 = sbr.rel (%p421) target = $region68
      $region67: #{flat_han_attention.1} parent=5 // pred_region
        %s425 = ssub.s32 %s23, 1
        %p426 = scmp.lt.s32.totalorder %s28, 1
        %s427 = scalar_select %p426, %s28, 1
        %s428 = smul.addr %s427, 8
        %s429 = scalar_lea.vmem %s0, %s428
        %p430 = pneg %p49
        %p431 = pneg %p46
        %p432 = scmp.lt.s32.totalorder %s28, 1
        %s433 = scalar_select %p432, %s28, 1
        %s434 = smul.addr %s433, 4
        %s435 = smul.addr %s434, 8
        %s436 = scalar_lea.vmem %s1, %s435
        %p437 = pneg %p75
        %p438 = pneg %p72
        %p439 = scmp.lt.s32.totalorder %s28, 1
        %s440 = scalar_select %p439, %s28, 1
        %s441 = smul.addr %s440, 2
        %s442 = smul.addr %s441, 8
        %s443 = scalar_lea.vmem %s2, %s442
        %p444 = pneg %p101
        %p445 = pneg %p98
        %p446 = scmp.lt.s32.totalorder %s28, 1
        %s447 = scalar_select %p446, %s28, 1
        %s448 = scalar_lea.vmem %s3, %s447
        %p449 = pneg %p127
        %p450 = pneg %p124
        %p451 = pneg %p148
        %p452 = pneg %p145
        %p453 = pneg %p169
        %p454 = pneg %p166
        %p455 = pneg %p190
        %p456 = pneg %p187
        %p457 = pneg %p211
        %p458 = pneg %p208
        %p459 = pneg %p232
        %p460 = pneg %p229
        %p461 = pneg %p253
        %p462 = pneg %p250
        %p463 = pneg %p274
        %p464 = pneg %p271
        %p465 = pneg %p295
        %p466 = pneg %p292
        %p467 = pneg %p321
        %p468 = pneg %p318
        %p469 = scmp.lt.s32.totalorder %s28, 1
        %s470 = scalar_select %p469, %s28, 1
        %s471 = smul.addr %s470, 8
        %s472 = scalar_lea.vmem %s12, %s471
        %p473 = pneg %p347
        %p474 = pneg %p344
        %s475 = sand.u32 %s334, 1
        %s476 = scalar_lea.sflag [#allocation3], %s475
        %s477 = sand.u32 %s334, 1
        %s478 = smul.addr %s477, 8
        %s479 = scalar_lea.vmem [#allocation2], %s478
        %p480 = scmp.lt.s32.totalorder %s28, 1
        %s481 = scalar_select %p480, %s28, 1
        %s482 = smul.addr %s481, 8
        %s483 = scalar_lea.vmem %s0, %s482
        %p484 = scmp.lt.s32.totalorder %s28, 1
        %s485 = scalar_select %p484, %s28, 1
        %s486 = smul.addr %s485, 4
        %s487 = smul.addr %s486, 8
        %s488 = scalar_lea.vmem %s1, %s487
        %p489 = scmp.lt.s32.totalorder %s28, 1
        %s490 = scalar_select %p489, %s28, 1
        %s491 = smul.addr %s490, 2
        %s492 = smul.addr %s491, 8
        %s493 = scalar_lea.vmem %s2, %s492
        %p494 = scmp.lt.s32.totalorder %s28, 1
        %s495 = scalar_select %p494, %s28, 1
        %s496 = scalar_lea.vmem %s3, %s495
        %p497 = scmp.lt.s32.totalorder %s28, 1
        %s498 = scalar_select %p497, %s28, 1
        %s499 = smul.addr %s498, 8
        %s500 = scalar_lea.vmem %s12, %s499
        %v501 = vld [vmem:[%s483] sm:$0xff]
        %v502 = vld [vmem:[%s488] sm:$0xff]
        %v503 = vld [vmem:[%s488 + $0x8] sm:$0xff]
        %v504 = vld [vmem:[%s488 + $0x10] sm:$0xff]
        %v505 = vld [vmem:[%s488 + $0x18] sm:$0xff]
        %v506 = vld [vmem:[%s493] sm:$0xff]
        %v507 = vld [vmem:[%s493 + $0x8] sm:$0xff]
        %v508 = vld [vmem:[%s496] sm:$0x1]
        %v510 = vlaneseq
        %v511 = vshrl.u32 %v510, 7
        %v512 = vsub.s32 0, %v511
        %v513 = vrot.slane %v508, %v512
        %v515 = vld [vmem:[%s4] sm:$0xff]
        %v516 = vld [vmem:[%s4 + $0x8] sm:$0xff]
        %v517 = vld [vmem:[%s4 + $0x10] sm:$0xff]
        %v518 = vld [vmem:[%s4 + $0x18] sm:$0xff]
        %v519 = vld [vmem:[%s8] sm:$0x1]
        %v521 = vlaneseq
        %v522 = vshrl.u32 %v521, 7
        %v523 = vsub.s32 0, %v522
        %v524 = vrot.slane %v519, %v523
        %vm526 = vcmask 261120
        %v528 = vsel %vm526, %v501, 0
        %530 = vmatprep.subr.mxu0 0.0
        %531 = vmatpush1.msra.mxu0 %v515
        %532 = vmatprep.subr.mxu0 0.0
        %533 = vmatpush1.msra.mxu0 %v516
        %534 = vmatprep.subr.mxu0 0.0
        %535 = vmatpush1.msra.mxu0 %v517
        %536 = vmatprep.subr.mxu0 0.0
        %537 = vmatpush1.msra.mxu0 %v518
        %538 = vmatprep.subr.mxu0 0.0
        %539 = vmatpush1.msra.mxu0 0.0
        %540 = vmatprep.subr.mxu0 0.0
        %541 = vmatpush1.msra.mxu0 0.0
        %542 = vmatprep.subr.mxu0 0.0
        %543 = vmatpush1.msra.mxu0 0.0
        %544 = vmatprep.subr.mxu0 0.0
        %545 = vmatpush1.msra.mxu0 0.0
        %546 = vmatprep.subr.mxu0 0.0
        %547 = vmatpush1.msra.mxu0 0.0
        %548 = vmatprep.subr.mxu0 0.0
        %549 = vmatpush1.msra.mxu0 0.0
        %550 = vmatprep.subr.mxu0 0.0
        %551 = vmatpush1.msra.mxu0 0.0
        %552 = vmatprep.subr.mxu0 0.0
        %553 = vmatpush1.msra.mxu0 0.0
        %554 = vmatprep.subr.mxu0 0.0
        %555 = vmatpush1.msra.mxu0 0.0
        %556 = vmatprep.subr.mxu0 0.0
        %557 = vmatpush1.msra.mxu0 0.0
        %558 = vmatprep.subr.mxu0 0.0
        %559 = vmatpush1.msra.mxu0 0.0
        %560 = vmatprep.subr.mxu0 0.0
        %561 = vmatpush1.msra.mxu0 0.0
        %562 = vmatprep.subr.mxu0 0.0
        %563 = vmatpush1.msra.mxu0 0.0
        %564 = vmatprep.subr.mxu0 0.0
        %565 = vmatpush1.msra.mxu0 0.0
        %566 = vmatprep.subr.mxu0 0.0
        %567 = vmatpush1.msra.mxu0 0.0
        %568 = vmatprep.subr.mxu0 0.0
        %569 = vmatpush1.msra.mxu0 0.0
        %570 = vmatprep.subr.mxu0 0.0
        %571 = vmatpush1.msra.mxu0 0.0
        %572 = vmatprep.subr.mxu0 0.0
        %573 = vmatpush1.msra.mxu0 0.0
        %574 = vmatprep.subr.mxu0 0.0
        %575 = vmatpush1.msra.mxu0 0.0
        %576 = vmatprep.subr.mxu0 0.0
        %577 = vmatpush1.msra.mxu0 0.0
        %578 = vmatprep.subr.mxu0 0.0
        %579 = vmatpush1.msra.mxu0 0.0
        %580 = vmatprep.subr.mxu0 0.0
        %581 = vmatpush1.msra.mxu0 0.0
        %582 = vmatprep.subr.mxu0 0.0
        %583 = vmatpush1.msra.mxu0 0.0
        %584 = vmatprep.subr.mxu0 0.0
        %585 = vmatpush1.msra.mxu0 0.0
        %586 = vmatprep.subr.mxu0 0.0
        %587 = vmatpush1.msra.mxu0 0.0
        %588 = vmatprep.subr.mxu0 0.0
        %589 = vmatpush1.msra.mxu0 0.0
        %590 = vmatprep.subr.mxu0 0.0
        %591 = vmatpush1.msra.mxu0 0.0
        %592 = vmatprep.subr.mxu0 0.0
        %593 = vmatpush1.msra.mxu0 0.0
        %594 = vmatprep.mubr.f32.mxu0 0.0
        %595 = vmatmul.mubr.f32.gmra.mrb[0].mxu0 %v528
        %v596 = vpop.f32.mrb[0].mxu0
        %v597 = vadd.f32 %v524, %v596
        %v598 = vpop.f32.mrb[0].mxu0
        %599 = vdwg.mxu0
        %v600 = vmul.f32 %v597, 0.35355338
        %v601 = vld [vmem:[%s5] sm:$0xff]
        %v602 = vld [vmem:[%s5 + $0x8] sm:$0xff]
        %v603 = vld [vmem:[%s5 + $0x10] sm:$0xff]
        %v604 = vld [vmem:[%s5 + $0x18] sm:$0xff]
        %v605 = vld [vmem:[%s9] sm:$0xff]
        %v606 = vld [vmem:[%s9 + $0x8] sm:$0xff]
        %v607 = vld [vmem:[%s9 + $0x10] sm:$0xff]
        %v608 = vld [vmem:[%s9 + $0x18] sm:$0xff]
        %610 = vset.pattern.permute.xlu0 0
        %611 = vperm.xlu0 %610, %v605
        %v612 = vpop.permute.xlu0 %611
        %615 = vset.pattern.permute.xlu0 0
        %616 = vperm.xlu0 %615, %v606
        %v617 = vpop.permute.xlu0 %616
        %620 = vset.pattern.permute.xlu0 0
        %621 = vperm.xlu0 %620, %v607
        %v622 = vpop.permute.xlu0 %621
        %625 = vset.pattern.permute.xlu0 0
        %626 = vperm.xlu0 %625, %v608
        %v627 = vpop.permute.xlu0 %626
        %v630 = vsel %vm526, %v601, 0
        %v633 = vsel %vm526, %v602, 0
        %v636 = vsel %vm526, %v603, 0
        %v639 = vsel %vm526, %v604, 0
        %641 = vmatprep.subr.mxu0 0.0
        %642 = vmatpush1.msra.mxu0 %v502
        %643 = vmatprep.subr.mxu0 0.0
        %644 = vmatpush1.msra.mxu0 %v503
        %645 = vmatprep.subr.mxu0 0.0
        %646 = vmatpush1.msra.mxu0 %v504
        %647 = vmatprep.subr.mxu0 0.0
        %648 = vmatpush1.msra.mxu0 %v505
        %649 = vmatprep.subr.mxu0 0.0
        %650 = vmatpush1.msra.mxu0 0.0
        %651 = vmatprep.subr.mxu0 0.0
        %652 = vmatpush1.msra.mxu0 0.0
        %653 = vmatprep.subr.mxu0 0.0
        %654 = vmatpush1.msra.mxu0 0.0
        %655 = vmatprep.subr.mxu0 0.0
        %656 = vmatpush1.msra.mxu0 0.0
        %657 = vmatprep.subr.mxu0 0.0
        %658 = vmatpush1.msra.mxu0 0.0
        %659 = vmatprep.subr.mxu0 0.0
        %660 = vmatpush1.msra.mxu0 0.0
        %661 = vmatprep.subr.mxu0 0.0
        %662 = vmatpush1.msra.mxu0 0.0
        %663 = vmatprep.subr.mxu0 0.0
        %664 = vmatpush1.msra.mxu0 0.0
        %665 = vmatprep.subr.mxu0 0.0
        %666 = vmatpush1.msra.mxu0 0.0
        %667 = vmatprep.subr.mxu0 0.0
        %668 = vmatpush1.msra.mxu0 0.0
        %669 = vmatprep.subr.mxu0 0.0
        %670 = vmatpush1.msra.mxu0 0.0
        %671 = vmatprep.subr.mxu0 0.0
        %672 = vmatpush1.msra.mxu0 0.0
        %673 = vmatprep.subr.mxu0 0.0
        %674 = vmatpush1.msra.mxu0 0.0
        %675 = vmatprep.subr.mxu0 0.0
        %676 = vmatpush1.msra.mxu0 0.0
        %677 = vmatprep.subr.mxu0 0.0
        %678 = vmatpush1.msra.mxu0 0.0
        %679 = vmatprep.subr.mxu0 0.0
        %680 = vmatpush1.msra.mxu0 0.0
        %681 = vmatprep.subr.mxu0 0.0
        %682 = vmatpush1.msra.mxu0 0.0
        %683 = vmatprep.subr.mxu0 0.0
        %684 = vmatpush1.msra.mxu0 0.0
        %685 = vmatprep.subr.mxu0 0.0
        %686 = vmatpush1.msra.mxu0 0.0
        %687 = vmatprep.subr.mxu0 0.0
        %688 = vmatpush1.msra.mxu0 0.0
        %689 = vmatprep.subr.mxu0 0.0
        %690 = vmatpush1.msra.mxu0 0.0
        %691 = vmatprep.subr.mxu0 0.0
        %692 = vmatpush1.msra.mxu0 0.0
        %693 = vmatprep.subr.mxu0 0.0
        %694 = vmatpush1.msra.mxu0 0.0
        %695 = vmatprep.subr.mxu0 0.0
        %696 = vmatpush1.msra.mxu0 0.0
        %697 = vmatprep.subr.mxu0 0.0
        %698 = vmatpush1.msra.mxu0 0.0
        %699 = vmatprep.subr.mxu0 0.0
        %700 = vmatpush1.msra.mxu0 0.0
        %701 = vmatprep.subr.mxu0 0.0
        %702 = vmatpush1.msra.mxu0 0.0
        %703 = vmatprep.subr.mxu0 0.0
        %704 = vmatpush1.msra.mxu0 0.0
        %705 = vmatprep.mubr.f32.mxu0 0.0
        %706 = vmatmul.mubr.f32.gmra.mrb[0].mxu0 %v630
        %v707 = vpop.f32.mrb[0].mxu0
        %v708 = vadd.f32 %v612, %v707
        %v709 = vpop.f32.mrb[0].mxu0
        %710 = vmatprep.mubr.f32.mxu0 0.0
        %711 = vmatmul.mubr.f32.gmra.mrb[0].mxu0 %v633
        %v712 = vpop.f32.mrb[0].mxu0
        %v713 = vadd.f32 %v617, %v712
        %v714 = vpop.f32.mrb[0].mxu0
        %715 = vmatprep.mubr.f32.mxu0 0.0
        %716 = vmatmul.mubr.f32.gmra.mrb[0].mxu0 %v636
        %v717 = vpop.f32.mrb[0].mxu0
        %v718 = vadd.f32 %v622, %v717
        %v719 = vpop.f32.mrb[0].mxu0
        %720 = vmatprep.mubr.f32.mxu0 0.0
        %721 = vmatmul.mubr.f32.gmra.mrb[0].mxu0 %v639
        %v722 = vpop.f32.mrb[0].mxu0
        %v723 = vadd.f32 %v627, %v722
        %v724 = vpop.f32.mrb[0].mxu0
        %725 = vdwg.mxu0
        %v726 = vld [vmem:[%s6] sm:$0xff]
        %v727 = vld [vmem:[%s6 + $0x8] sm:$0xff]
        %v728 = vld [vmem:[%s6 + $0x10] sm:$0xff]
        %v729 = vld [vmem:[%s6 + $0x18] sm:$0xff]
        %v730 = vld [vmem:[%s10] sm:$0x1]
        %v732 = vlaneseq
        %v733 = vshrl.u32 %v732, 7
        %v734 = vsub.s32 0, %v733
        %v735 = vrot.slane %v730, %v734
        %v738 = vsel %vm526, %v506, 0
        %v741 = vsel %vm526, %v507, 0
        %743 = vmatprep.subr.mxu0 0.0
        %744 = vmatpush1.msra.mxu0 %v726
        %745 = vmatprep.subr.mxu0 0.0
        %746 = vmatpush1.msra.mxu0 %v727
        %747 = vmatprep.subr.mxu0 0.0
        %748 = vmatpush1.msra.mxu0 %v728
        %749 = vmatprep.subr.mxu0 0.0
        %750 = vmatpush1.msra.mxu0 %v729
        %751 = vmatprep.subr.mxu0 0.0
        %752 = vmatpush1.msra.mxu0 0.0
        %753 = vmatprep.subr.mxu0 0.0
        %754 = vmatpush1.msra.mxu0 0.0
        %755 = vmatprep.subr.mxu0 0.0
        %756 = vmatpush1.msra.mxu0 0.0
        %757 = vmatprep.subr.mxu0 0.0
        %758 = vmatpush1.msra.mxu0 0.0
        %759 = vmatprep.subr.mxu0 0.0
        %760 = vmatpush1.msra.mxu0 0.0
        %761 = vmatprep.subr.mxu0 0.0
        %762 = vmatpush1.msra.mxu0 0.0
        %763 = vmatprep.subr.mxu0 0.0
        %764 = vmatpush1.msra.mxu0 0.0
        %765 = vmatprep.subr.mxu0 0.0
        %766 = vmatpush1.msra.mxu0 0.0
        %767 = vmatprep.subr.mxu0 0.0
        %768 = vmatpush1.msra.mxu0 0.0
        %769 = vmatprep.subr.mxu0 0.0
        %770 = vmatpush1.msra.mxu0 0.0
        %771 = vmatprep.subr.mxu0 0.0
        %772 = vmatpush1.msra.mxu0 0.0
        %773 = vmatprep.subr.mxu0 0.0
        %774 = vmatpush1.msra.mxu0 0.0
        %775 = vmatprep.subr.mxu0 0.0
        %776 = vmatpush1.msra.mxu0 0.0
        %777 = vmatprep.subr.mxu0 0.0
        %778 = vmatpush1.msra.mxu0 0.0
        %779 = vmatprep.subr.mxu0 0.0
        %780 = vmatpush1.msra.mxu0 0.0
        %781 = vmatprep.subr.mxu0 0.0
        %782 = vmatpush1.msra.mxu0 0.0
        %783 = vmatprep.subr.mxu0 0.0
        %784 = vmatpush1.msra.mxu0 0.0
        %785 = vmatprep.subr.mxu0 0.0
        %786 = vmatpush1.msra.mxu0 0.0
        %787 = vmatprep.subr.mxu0 0.0
        %788 = vmatpush1.msra.mxu0 0.0
        %789 = vmatprep.subr.mxu0 0.0
        %790 = vmatpush1.msra.mxu0 0.0
        %791 = vmatprep.subr.mxu0 0.0
        %792 = vmatpush1.msra.mxu0 0.0
        %793 = vmatprep.subr.mxu0 0.0
        %794 = vmatpush1.msra.mxu0 0.0
        %795 = vmatprep.subr.mxu0 0.0
        %796 = vmatpush1.msra.mxu0 0.0
        %797 = vmatprep.subr.mxu0 0.0
        %798 = vmatpush1.msra.mxu0 0.0
        %799 = vmatprep.subr.mxu0 0.0
        %800 = vmatpush1.msra.mxu0 0.0
        %801 = vmatprep.subr.mxu0 0.0
        %802 = vmatpush1.msra.mxu0 0.0
        %803 = vmatprep.subr.mxu0 0.0
        %804 = vmatpush1.msra.mxu0 0.0
        %805 = vmatprep.subr.mxu0 0.0
        %806 = vmatpush1.msra.mxu0 0.0
        %807 = vmatprep.mubr.f32.mxu0 0.0
        %808 = vmatmul.mubr.f32.gmra.mrb[0].mxu0 %v738
        %v809 = vpop.f32.mrb[0].mxu0
        %v810 = vadd.f32 %v735, %v809
        %v811 = vpop.f32.mrb[0].mxu0
        %812 = vmatprep.mubr.f32.mxu0 0.0
        %813 = vmatmul.mubr.f32.gmra.mrb[0].mxu0 %v741
        %v814 = vpop.f32.mrb[0].mxu0
        %v815 = vadd.f32 %v735, %v814
        %v816 = vpop.f32.mrb[0].mxu0
        %817 = vdwg.mxu0
        %vm818 = vcmask 64512
        %v820 = vsel %vm818, %v600, 0
        %822 = vmatprep.subr.mxu0 0.0
        %823 = vmatpush1.msra.mxu0 %v708
        %824 = vmatprep.subr.mxu0 0.0
        %825 = vmatpush1.msra.mxu0 0.0
        %826 = vmatprep.subr.mxu0 0.0
        %827 = vmatpush1.msra.mxu0 0.0
        %828 = vmatprep.subr.mxu0 0.0
        %829 = vmatpush1.msra.mxu0 0.0
        %830 = vmatprep.subr.mxu0 0.0
        %831 = vmatpush1.msra.mxu0 0.0
        %832 = vmatprep.subr.mxu0 0.0
        %833 = vmatpush1.msra.mxu0 0.0
        %834 = vmatprep.subr.mxu0 0.0
        %835 = vmatpush1.msra.mxu0 0.0
        %836 = vmatprep.subr.mxu0 0.0
        %837 = vmatpush1.msra.mxu0 0.0
        %838 = vmatprep.subr.mxu0 0.0
        %839 = vmatpush1.msra.mxu0 0.0
        %840 = vmatprep.subr.mxu0 0.0
        %841 = vmatpush1.msra.mxu0 0.0
        %842 = vmatprep.subr.mxu0 0.0
        %843 = vmatpush1.msra.mxu0 0.0
        %844 = vmatprep.subr.mxu0 0.0
        %845 = vmatpush1.msra.mxu0 0.0
        %846 = vmatprep.subr.mxu0 0.0
        %847 = vmatpush1.msra.mxu0 0.0
        %848 = vmatprep.subr.mxu0 0.0
        %849 = vmatpush1.msra.mxu0 0.0
        %850 = vmatprep.subr.mxu0 0.0
        %851 = vmatpush1.msra.mxu0 0.0
        %852 = vmatprep.subr.mxu0 0.0
        %853 = vmatpush1.msra.mxu0 0.0
        %854 = vmatprep.subr.mxu0 0.0
        %855 = vmatpush1.msra.mxu0 0.0
        %856 = vmatprep.subr.mxu0 0.0
        %857 = vmatpush1.msra.mxu0 0.0
        %858 = vmatprep.subr.mxu0 0.0
        %859 = vmatpush1.msra.mxu0 0.0
        %860 = vmatprep.subr.mxu0 0.0
        %861 = vmatpush1.msra.mxu0 0.0
        %862 = vmatprep.subr.mxu0 0.0
        %863 = vmatpush1.msra.mxu0 0.0
        %864 = vmatprep.subr.mxu0 0.0
        %865 = vmatpush1.msra.mxu0 0.0
        %866 = vmatprep.subr.mxu0 0.0
        %867 = vmatpush1.msra.mxu0 0.0
        %868 = vmatprep.subr.mxu0 0.0
        %869 = vmatpush1.msra.mxu0 0.0
        %870 = vmatprep.subr.mxu0 0.0
        %871 = vmatpush1.msra.mxu0 0.0
        %872 = vmatprep.subr.mxu0 0.0
        %873 = vmatpush1.msra.mxu0 0.0
        %874 = vmatprep.subr.mxu0 0.0
        %875 = vmatpush1.msra.mxu0 0.0
        %876 = vmatprep.subr.mxu0 0.0
        %877 = vmatpush1.msra.mxu0 0.0
        %878 = vmatprep.subr.mxu0 0.0
        %879 = vmatpush1.msra.mxu0 0.0
        %880 = vmatprep.subr.mxu0 0.0
        %881 = vmatpush1.msra.mxu0 0.0
        %882 = vmatprep.subr.mxu0 0.0
        %883 = vmatpush1.msra.mxu0 0.0
        %884 = vmatprep.subr.mxu0 0.0
        %885 = vmatpush1.msra.mxu0 0.0
        %886 = vmatprep.mubr.f32.mxu0 0.0
        %887 = vmatmul.mubr.f32.gmra.mrb[0].mxu0 %v820
        %v888 = vpop.f32.mrb[0].mxu0
        %v889 = vadd.f32 %v513, %v888
        %v890 = vpop.f32.mrb[0].mxu0
        %891 = vdwg.mxu0
        %vm892 = vcmask 130048
        %v893 = vsel %vm892, %v889, -inf
        %894 = vmax.xlane.f32.xlu0 %v893
        %v895 = vpop.xlane.xlu0 %894
        %v896 = vsub.f32 %v889, %v895
        %v897 = vmul.f32 %v896, 1.442695
        %v898 = vpow.pop %v897
        %v899 = vsel %vm892, %v898, 0.0
        %900 = vadd.xlane.f32.xlu0 %v899
        %v901 = vpop.xlane.xlu0 %900
        %v902 = vrcp.pop %v901
        %v903 = vmul.f32 %v898, %v902
        %v905 = vsel %vm892, %v903, 0
        %907 = vmatprep.subr.mxu0 0.0
        %908 = vmatpush1.msra.mxu0 %v810
        %909 = vmatprep.subr.mxu0 0.0
        %910 = vmatpush1.msra.mxu0 %v815
        %911 = vmatprep.subr.mxu0 0.0
        %912 = vmatpush1.msra.mxu0 0.0
        %913 = vmatprep.subr.mxu0 0.0
        %914 = vmatpush1.msra.mxu0 0.0
        %915 = vmatprep.subr.mxu0 0.0
        %916 = vmatpush1.msra.mxu0 0.0
        %917 = vmatprep.subr.mxu0 0.0
        %918 = vmatpush1.msra.mxu0 0.0
        %919 = vmatprep.subr.mxu0 0.0
        %920 = vmatpush1.msra.mxu0 0.0
        %921 = vmatprep.subr.mxu0 0.0
        %922 = vmatpush1.msra.mxu0 0.0
        %923 = vmatprep.subr.mxu0 0.0
        %924 = vmatpush1.msra.mxu0 0.0
        %925 = vmatprep.subr.mxu0 0.0
        %926 = vmatpush1.msra.mxu0 0.0
        %927 = vmatprep.subr.mxu0 0.0
        %928 = vmatpush1.msra.mxu0 0.0
        %929 = vmatprep.subr.mxu0 0.0
        %930 = vmatpush1.msra.mxu0 0.0
        %931 = vmatprep.subr.mxu0 0.0
        %932 = vmatpush1.msra.mxu0 0.0
        %933 = vmatprep.subr.mxu0 0.0
        %934 = vmatpush1.msra.mxu0 0.0
        %935 = vmatprep.subr.mxu0 0.0
        %936 = vmatpush1.msra.mxu0 0.0
        %937 = vmatprep.subr.mxu0 0.0
        %938 = vmatpush1.msra.mxu0 0.0
        %939 = vmatprep.subr.mxu0 0.0
        %940 = vmatpush1.msra.mxu0 0.0
        %941 = vmatprep.subr.mxu0 0.0
        %942 = vmatpush1.msra.mxu0 0.0
        %943 = vmatprep.subr.mxu0 0.0
        %944 = vmatpush1.msra.mxu0 0.0
        %945 = vmatprep.subr.mxu0 0.0
        %946 = vmatpush1.msra.mxu0 0.0
        %947 = vmatprep.subr.mxu0 0.0
        %948 = vmatpush1.msra.mxu0 0.0
        %949 = vmatprep.subr.mxu0 0.0
        %950 = vmatpush1.msra.mxu0 0.0
        %951 = vmatprep.subr.mxu0 0.0
        %952 = vmatpush1.msra.mxu0 0.0
        %953 = vmatprep.subr.mxu0 0.0
        %954 = vmatpush1.msra.mxu0 0.0
        %955 = vmatprep.subr.mxu0 0.0
        %956 = vmatpush1.msra.mxu0 0.0
        %957 = vmatprep.subr.mxu0 0.0
        %958 = vmatpush1.msra.mxu0 0.0
        %959 = vmatprep.subr.mxu0 0.0
        %960 = vmatpush1.msra.mxu0 0.0
        %961 = vmatprep.subr.mxu0 0.0
        %962 = vmatpush1.msra.mxu0 0.0
        %963 = vmatprep.subr.mxu0 0.0
        %964 = vmatpush1.msra.mxu0 0.0
        %965 = vmatprep.subr.mxu0 0.0
        %966 = vmatpush1.msra.mxu0 0.0
        %967 = vmatprep.subr.mxu0 0.0
        %968 = vmatpush1.msra.mxu0 0.0
        %969 = vmatprep.subr.mxu0 0.0
        %970 = vmatpush1.msra.mxu0 0.0
        %971 = vmatprep.mubr.f32.mxu0 0.0
        %972 = vmatmul.mubr.f32.gmra.mrb[0].mxu0 %v905
        %v973 = vpop.f32.mrb[0].mxu0
        %v974 = vadd.f32 0.0, %v973
        %v975 = vpop.f32.mrb[0].mxu0
        %976 = vdwg.mxu0
        %v977 = vadd.f32 %v903, 0.0
        %978 = vrot.lane.b32.xlu0 %v600, 120
        %v979 = vpop.permute.xlu0 %978
        %v980 = vsel %vm818, %v979, 0
        %982 = vmatprep.subr.mxu0 0.0
        %983 = vmatpush1.msra.mxu0 %v713
        %984 = vmatprep.subr.mxu0 0.0
        %985 = vmatpush1.msra.mxu0 0.0
        %986 = vmatprep.subr.mxu0 0.0
        %987 = vmatpush1.msra.mxu0 0.0
        %988 = vmatprep.subr.mxu0 0.0
        %989 = vmatpush1.msra.mxu0 0.0
        %990 = vmatprep.subr.mxu0 0.0
        %991 = vmatpush1.msra.mxu0 0.0
        %992 = vmatprep.subr.mxu0 0.0
        %993 = vmatpush1.msra.mxu0 0.0
        %994 = vmatprep.subr.mxu0 0.0
        %995 = vmatpush1.msra.mxu0 0.0
        %996 = vmatprep.subr.mxu0 0.0
        %997 = vmatpush1.msra.mxu0 0.0
        %998 = vmatprep.subr.mxu0 0.0
        %999 = vmatpush1.msra.mxu0 0.0
        %1000 = vmatprep.subr.mxu0 0.0
        %1001 = vmatpush1.msra.mxu0 0.0
        %1002 = vmatprep.subr.mxu0 0.0
        %1003 = vmatpush1.msra.mxu0 0.0
        %1004 = vmatprep.subr.mxu0 0.0
        %1005 = vmatpush1.msra.mxu0 0.0
        %1006 = vmatprep.subr.mxu0 0.0
        %1007 = vmatpush1.msra.mxu0 0.0
        %1008 = vmatprep.subr.mxu0 0.0
        %1009 = vmatpush1.msra.mxu0 0.0
        %1010 = vmatprep.subr.mxu0 0.0
        %1011 = vmatpush1.msra.mxu0 0.0
        %1012 = vmatprep.subr.mxu0 0.0
        %1013 = vmatpush1.msra.mxu0 0.0
        %1014 = vmatprep.subr.mxu0 0.0
        %1015 = vmatpush1.msra.mxu0 0.0
        %1016 = vmatprep.subr.mxu0 0.0
        %1017 = vmatpush1.msra.mxu0 0.0
        %1018 = vmatprep.subr.mxu0 0.0
        %1019 = vmatpush1.msra.mxu0 0.0
        %1020 = vmatprep.subr.mxu0 0.0
        %1021 = vmatpush1.msra.mxu0 0.0
        %1022 = vmatprep.subr.mxu0 0.0
        %1023 = vmatpush1.msra.mxu0 0.0
        %1024 = vmatprep.subr.mxu0 0.0
        %1025 = vmatpush1.msra.mxu0 0.0
        %1026 = vmatprep.subr.mxu0 0.0
        %1027 = vmatpush1.msra.mxu0 0.0
        %1028 = vmatprep.subr.mxu0 0.0
        %1029 = vmatpush1.msra.mxu0 0.0
        %1030 = vmatprep.subr.mxu0 0.0
        %1031 = vmatpush1.msra.mxu0 0.0
        %1032 = vmatprep.subr.mxu0 0.0
        %1033 = vmatpush1.msra.mxu0 0.0
        %1034 = vmatprep.subr.mxu0 0.0
        %1035 = vmatpush1.msra.mxu0 0.0
        %1036 = vmatprep.subr.mxu0 0.0
        %1037 = vmatpush1.msra.mxu0 0.0
        %1038 = vmatprep.subr.mxu0 0.0
        %1039 = vmatpush1.msra.mxu0 0.0
        %1040 = vmatprep.subr.mxu0 0.0
        %1041 = vmatpush1.msra.mxu0 0.0
        %1042 = vmatprep.subr.mxu0 0.0
        %1043 = vmatpush1.msra.mxu0 0.0
        %1044 = vmatprep.subr.mxu0 0.0
        %1045 = vmatpush1.msra.mxu0 0.0
        %1046 = vmatprep.mubr.f32.mxu0 0.0
        %1047 = vmatmul.mubr.f32.gmra.mrb[0].mxu0 %v980
        %v1048 = vpop.f32.mrb[0].mxu0
        %v1049 = vadd.f32 %v513, %v1048
        %v1050 = vpop.f32.mrb[0].mxu0
        %1051 = vdwg.mxu0
        %v1052 = vsel %vm892, %v1049, -inf
        %1053 = vmax.xlane.f32.xlu0 %v1052
        %v1054 = vpop.xlane.xlu0 %1053
        %v1055 = vsub.f32 %v1049, %v1054
        %v1056 = vmul.f32 %v1055, 1.442695
        %v1057 = vpow.pop %v1056
        %v1058 = vsel %vm892, %v1057, 0.0
        %1059 = vadd.xlane.f32.xlu0 %v1058
        %v1060 = vpop.xlane.xlu0 %1059
        %v1061 = vrcp.pop %v1060
        %v1062 = vmul.f32 %v1057, %v1061
        %1065 = vrot.lane.b32.xlu0 %v810, 120
        %v1066 = vpop.permute.xlu0 %1065
        %1067 = vrot.lane.b32.xlu0 %v815, 120
        %v1068 = vpop.permute.xlu0 %1067
        %v1072 = vsel %vm892, %v1062, 0
        %1074 = vmatprep.subr.mxu0 0.0
        %1075 = vmatpush1.msra.mxu0 %v1066
        %1076 = vmatprep.subr.mxu0 0.0
        %1077 = vmatpush1.msra.mxu0 %v1068
        %1078 = vmatprep.subr.mxu0 0.0
        %1079 = vmatpush1.msra.mxu0 0.0
        %1080 = vmatprep.subr.mxu0 0.0
        %1081 = vmatpush1.msra.mxu0 0.0
        %1082 = vmatprep.subr.mxu0 0.0
        %1083 = vmatpush1.msra.mxu0 0.0
        %1084 = vmatprep.subr.mxu0 0.0
        %1085 = vmatpush1.msra.mxu0 0.0
        %1086 = vmatprep.subr.mxu0 0.0
        %1087 = vmatpush1.msra.mxu0 0.0
        %1088 = vmatprep.subr.mxu0 0.0
        %1089 = vmatpush1.msra.mxu0 0.0
        %1090 = vmatprep.subr.mxu0 0.0
        %1091 = vmatpush1.msra.mxu0 0.0
        %1092 = vmatprep.subr.mxu0 0.0
        %1093 = vmatpush1.msra.mxu0 0.0
        %1094 = vmatprep.subr.mxu0 0.0
        %1095 = vmatpush1.msra.mxu0 0.0
        %1096 = vmatprep.subr.mxu0 0.0
        %1097 = vmatpush1.msra.mxu0 0.0
        %1098 = vmatprep.subr.mxu0 0.0
        %1099 = vmatpush1.msra.mxu0 0.0
        %1100 = vmatprep.subr.mxu0 0.0
        %1101 = vmatpush1.msra.mxu0 0.0
        %1102 = vmatprep.subr.mxu0 0.0
        %1103 = vmatpush1.msra.mxu0 0.0
        %1104 = vmatprep.subr.mxu0 0.0
        %1105 = vmatpush1.msra.mxu0 0.0
        %1106 = vmatprep.subr.mxu0 0.0
        %1107 = vmatpush1.msra.mxu0 0.0
        %1108 = vmatprep.subr.mxu0 0.0
        %1109 = vmatpush1.msra.mxu0 0.0
        %1110 = vmatprep.subr.mxu0 0.0
        %1111 = vmatpush1.msra.mxu0 0.0
        %1112 = vmatprep.subr.mxu0 0.0
        %1113 = vmatpush1.msra.mxu0 0.0
        %1114 = vmatprep.subr.mxu0 0.0
        %1115 = vmatpush1.msra.mxu0 0.0
        %1116 = vmatprep.subr.mxu0 0.0
        %1117 = vmatpush1.msra.mxu0 0.0
        %1118 = vmatprep.subr.mxu0 0.0
        %1119 = vmatpush1.msra.mxu0 0.0
        %1120 = vmatprep.subr.mxu0 0.0
        %1121 = vmatpush1.msra.mxu0 0.0
        %1122 = vmatprep.subr.mxu0 0.0
        %1123 = vmatpush1.msra.mxu0 0.0
        %1124 = vmatprep.subr.mxu0 0.0
        %1125 = vmatpush1.msra.mxu0 0.0
        %1126 = vmatprep.subr.mxu0 0.0
        %1127 = vmatpush1.msra.mxu0 0.0
        %1128 = vmatprep.subr.mxu0 0.0
        %1129 = vmatpush1.msra.mxu0 0.0
        %1130 = vmatprep.subr.mxu0 0.0
        %1131 = vmatpush1.msra.mxu0 0.0
        %1132 = vmatprep.subr.mxu0 0.0
        %1133 = vmatpush1.msra.mxu0 0.0
        %1134 = vmatprep.subr.mxu0 0.0
        %1135 = vmatpush1.msra.mxu0 0.0
        %1136 = vmatprep.subr.mxu0 0.0
        %1137 = vmatpush1.msra.mxu0 0.0
        %1138 = vmatprep.mubr.f32.mxu0 0.0
        %1139 = vmatmul.mubr.f32.gmra.mrb[0].mxu0 %v1072
        %v1140 = vpop.f32.mrb[0].mxu0
        %v1141 = vadd.f32 0.0, %v1140
        %v1142 = vpop.f32.mrb[0].mxu0
        %1143 = vdwg.mxu0
        %v1144 = vadd.f32 %v977, %v1062
        %1145 = vrot.lane.b32.xlu0 %v600, 112
        %v1146 = vpop.permute.xlu0 %1145
        %v1147 = vsel %vm818, %v1146, 0
        %1149 = vmatprep.subr.mxu0 0.0
        %1150 = vmatpush1.msra.mxu0 %v718
        %1151 = vmatprep.subr.mxu0 0.0
        %1152 = vmatpush1.msra.mxu0 0.0
        %1153 = vmatprep.subr.mxu0 0.0
        %1154 = vmatpush1.msra.mxu0 0.0
        %1155 = vmatprep.subr.mxu0 0.0
        %1156 = vmatpush1.msra.mxu0 0.0
        %1157 = vmatprep.subr.mxu0 0.0
        %1158 = vmatpush1.msra.mxu0 0.0
        %1159 = vmatprep.subr.mxu0 0.0
        %1160 = vmatpush1.msra.mxu0 0.0
        %1161 = vmatprep.subr.mxu0 0.0
        %1162 = vmatpush1.msra.mxu0 0.0
        %1163 = vmatprep.subr.mxu0 0.0
        %1164 = vmatpush1.msra.mxu0 0.0
        %1165 = vmatprep.subr.mxu0 0.0
        %1166 = vmatpush1.msra.mxu0 0.0
        %1167 = vmatprep.subr.mxu0 0.0
        %1168 = vmatpush1.msra.mxu0 0.0
        %1169 = vmatprep.subr.mxu0 0.0
        %1170 = vmatpush1.msra.mxu0 0.0
        %1171 = vmatprep.subr.mxu0 0.0
        %1172 = vmatpush1.msra.mxu0 0.0
        %1173 = vmatprep.subr.mxu0 0.0
        %1174 = vmatpush1.msra.mxu0 0.0
        %1175 = vmatprep.subr.mxu0 0.0
        %1176 = vmatpush1.msra.mxu0 0.0
        %1177 = vmatprep.subr.mxu0 0.0
        %1178 = vmatpush1.msra.mxu0 0.0
        %1179 = vmatprep.subr.mxu0 0.0
        %1180 = vmatpush1.msra.mxu0 0.0
        %1181 = vmatprep.subr.mxu0 0.0
        %1182 = vmatpush1.msra.mxu0 0.0
        %1183 = vmatprep.subr.mxu0 0.0
        %1184 = vmatpush1.msra.mxu0 0.0
        %1185 = vmatprep.subr.mxu0 0.0
        %1186 = vmatpush1.msra.mxu0 0.0
        %1187 = vmatprep.subr.mxu0 0.0
        %1188 = vmatpush1.msra.mxu0 0.0
        %1189 = vmatprep.subr.mxu0 0.0
        %1190 = vmatpush1.msra.mxu0 0.0
        %1191 = vmatprep.subr.mxu0 0.0
        %1192 = vmatpush1.msra.mxu0 0.0
        %1193 = vmatprep.subr.mxu0 0.0
        %1194 = vmatpush1.msra.mxu0 0.0
        %1195 = vmatprep.subr.mxu0 0.0
        %1196 = vmatpush1.msra.mxu0 0.0
        %1197 = vmatprep.subr.mxu0 0.0
        %1198 = vmatpush1.msra.mxu0 0.0
        %1199 = vmatprep.subr.mxu0 0.0
        %1200 = vmatpush1.msra.mxu0 0.0
        %1201 = vmatprep.subr.mxu0 0.0
        %1202 = vmatpush1.msra.mxu0 0.0
        %1203 = vmatprep.subr.mxu0 0.0
        %1204 = vmatpush1.msra.mxu0 0.0
        %1205 = vmatprep.subr.mxu0 0.0
        %1206 = vmatpush1.msra.mxu0 0.0
        %1207 = vmatprep.subr.mxu0 0.0
        %1208 = vmatpush1.msra.mxu0 0.0
        %1209 = vmatprep.subr.mxu0 0.0
        %1210 = vmatpush1.msra.mxu0 0.0
        %1211 = vmatprep.subr.mxu0 0.0
        %1212 = vmatpush1.msra.mxu0 0.0
        %1213 = vmatprep.mubr.f32.mxu0 0.0
        %1214 = vmatmul.mubr.f32.gmra.mrb[0].mxu0 %v1147
        %v1215 = vpop.f32.mrb[0].mxu0
        %v1216 = vadd.f32 %v513, %v1215
        %v1217 = vpop.f32.mrb[0].mxu0
        %1218 = vdwg.mxu0
        %v1219 = vsel %vm892, %v1216, -inf
        %1220 = vmax.xlane.f32.xlu0 %v1219
        %v1221 = vpop.xlane.xlu0 %1220
        %v1222 = vsub.f32 %v1216, %v1221
        %v1223 = vmul.f32 %v1222, 1.442695
        %v1224 = vpow.pop %v1223
        %v1225 = vsel %vm892, %v1224, 0.0
        %1226 = vadd.xlane.f32.xlu0 %v1225
        %v1227 = vpop.xlane.xlu0 %1226
        %v1228 = vrcp.pop %v1227
        %v1229 = vmul.f32 %v1224, %v1228
        %1230 = vrot.lane.b32.xlu0 %v810, 112
        %v1231 = vpop.permute.xlu0 %1230
        %1232 = vrot.lane.b32.xlu0 %v815, 112
        %v1233 = vpop.permute.xlu0 %1232
        %v1237 = vsel %vm892, %v1229, 0
        %1239 = vmatprep.subr.mxu0 0.0
        %1240 = vmatpush1.msra.mxu0 %v1231
        %1241 = vmatprep.subr.mxu0 0.0
        %1242 = vmatpush1.msra.mxu0 %v1233
        %1243 = vmatprep.subr.mxu0 0.0
        %1244 = vmatpush1.msra.mxu0 0.0
        %1245 = vmatprep.subr.mxu0 0.0
        %1246 = vmatpush1.msra.mxu0 0.0
        %1247 = vmatprep.subr.mxu0 0.0
        %1248 = vmatpush1.msra.mxu0 0.0
        %1249 = vmatprep.subr.mxu0 0.0
        %1250 = vmatpush1.msra.mxu0 0.0
        %1251 = vmatprep.subr.mxu0 0.0
        %1252 = vmatpush1.msra.mxu0 0.0
        %1253 = vmatprep.subr.mxu0 0.0
        %1254 = vmatpush1.msra.mxu0 0.0
        %1255 = vmatprep.subr.mxu0 0.0
        %1256 = vmatpush1.msra.mxu0 0.0
        %1257 = vmatprep.subr.mxu0 0.0
        %1258 = vmatpush1.msra.mxu0 0.0
        %1259 = vmatprep.subr.mxu0 0.0
        %1260 = vmatpush1.msra.mxu0 0.0
        %1261 = vmatprep.subr.mxu0 0.0
        %1262 = vmatpush1.msra.mxu0 0.0
        %1263 = vmatprep.subr.mxu0 0.0
        %1264 = vmatpush1.msra.mxu0 0.0
        %1265 = vmatprep.subr.mxu0 0.0
        %1266 = vmatpush1.msra.mxu0 0.0
        %1267 = vmatprep.subr.mxu0 0.0
        %1268 = vmatpush1.msra.mxu0 0.0
        %1269 = vmatprep.subr.mxu0 0.0
        %1270 = vmatpush1.msra.mxu0 0.0
        %1271 = vmatprep.subr.mxu0 0.0
        %1272 = vmatpush1.msra.mxu0 0.0
        %1273 = vmatprep.subr.mxu0 0.0
        %1274 = vmatpush1.msra.mxu0 0.0
        %1275 = vmatprep.subr.mxu0 0.0
        %1276 = vmatpush1.msra.mxu0 0.0
        %1277 = vmatprep.subr.mxu0 0.0
        %1278 = vmatpush1.msra.mxu0 0.0
        %1279 = vmatprep.subr.mxu0 0.0
        %1280 = vmatpush1.msra.mxu0 0.0
        %1281 = vmatprep.subr.mxu0 0.0
        %1282 = vmatpush1.msra.mxu0 0.0
        %1283 = vmatprep.subr.mxu0 0.0
        %1284 = vmatpush1.msra.mxu0 0.0
        %1285 = vmatprep.subr.mxu0 0.0
        %1286 = vmatpush1.msra.mxu0 0.0
        %1287 = vmatprep.subr.mxu0 0.0
        %1288 = vmatpush1.msra.mxu0 0.0
        %1289 = vmatprep.subr.mxu0 0.0
        %1290 = vmatpush1.msra.mxu0 0.0
        %1291 = vmatprep.subr.mxu0 0.0
        %1292 = vmatpush1.msra.mxu0 0.0
        %1293 = vmatprep.subr.mxu0 0.0
        %1294 = vmatpush1.msra.mxu0 0.0
        %1295 = vmatprep.subr.mxu0 0.0
        %1296 = vmatpush1.msra.mxu0 0.0
        %1297 = vmatprep.subr.mxu0 0.0
        %1298 = vmatpush1.msra.mxu0 0.0
        %1299 = vmatprep.subr.mxu0 0.0
        %1300 = vmatpush1.msra.mxu0 0.0
        %1301 = vmatprep.subr.mxu0 0.0
        %1302 = vmatpush1.msra.mxu0 0.0
        %1303 = vmatprep.mubr.f32.mxu0 0.0
        %1304 = vmatmul.mubr.f32.gmra.mrb[0].mxu0 %v1237
        %v1305 = vpop.f32.mrb[0].mxu0
        %v1306 = vadd.f32 0.0, %v1305
        %v1307 = vpop.f32.mrb[0].mxu0
        %1308 = vdwg.mxu0
        %v1309 = vadd.f32 %v1144, %v1229
        %1310 = vrot.lane.b32.xlu0 %v600, 104
        %v1311 = vpop.permute.xlu0 %1310
        %v1312 = vsel %vm818, %v1311, 0
        %1314 = vmatprep.subr.mxu0 0.0
        %1315 = vmatpush1.msra.mxu0 %v723
        %1316 = vmatprep.subr.mxu0 0.0
        %1317 = vmatpush1.msra.mxu0 0.0
        %1318 = vmatprep.subr.mxu0 0.0
        %1319 = vmatpush1.msra.mxu0 0.0
        %1320 = vmatprep.subr.mxu0 0.0
        %1321 = vmatpush1.msra.mxu0 0.0
        %1322 = vmatprep.subr.mxu0 0.0
        %1323 = vmatpush1.msra.mxu0 0.0
        %1324 = vmatprep.subr.mxu0 0.0
        %1325 = vmatpush1.msra.mxu0 0.0
        %1326 = vmatprep.subr.mxu0 0.0
        %1327 = vmatpush1.msra.mxu0 0.0
        %1328 = vmatprep.subr.mxu0 0.0
        %1329 = vmatpush1.msra.mxu0 0.0
        %1330 = vmatprep.subr.mxu0 0.0
        %1331 = vmatpush1.msra.mxu0 0.0
        %1332 = vmatprep.subr.mxu0 0.0
        %1333 = vmatpush1.msra.mxu0 0.0
        %1334 = vmatprep.subr.mxu0 0.0
        %1335 = vmatpush1.msra.mxu0 0.0
        %1336 = vmatprep.subr.mxu0 0.0
        %1337 = vmatpush1.msra.mxu0 0.0
        %1338 = vmatprep.subr.mxu0 0.0
        %1339 = vmatpush1.msra.mxu0 0.0
        %1340 = vmatprep.subr.mxu0 0.0
        %1341 = vmatpush1.msra.mxu0 0.0
        %1342 = vmatprep.subr.mxu0 0.0
        %1343 = vmatpush1.msra.mxu0 0.0
        %1344 = vmatprep.subr.mxu0 0.0
        %1345 = vmatpush1.msra.mxu0 0.0
        %1346 = vmatprep.subr.mxu0 0.0
        %1347 = vmatpush1.msra.mxu0 0.0
        %1348 = vmatprep.subr.mxu0 0.0
        %1349 = vmatpush1.msra.mxu0 0.0
        %1350 = vmatprep.subr.mxu0 0.0
        %1351 = vmatpush1.msra.mxu0 0.0
        %1352 = vmatprep.subr.mxu0 0.0
        %1353 = vmatpush1.msra.mxu0 0.0
        %1354 = vmatprep.subr.mxu0 0.0
        %1355 = vmatpush1.msra.mxu0 0.0
        %1356 = vmatprep.subr.mxu0 0.0
        %1357 = vmatpush1.msra.mxu0 0.0
        %1358 = vmatprep.subr.mxu0 0.0
        %1359 = vmatpush1.msra.mxu0 0.0
        %1360 = vmatprep.subr.mxu0 0.0
        %1361 = vmatpush1.msra.mxu0 0.0
        %1362 = vmatprep.subr.mxu0 0.0
        %1363 = vmatpush1.msra.mxu0 0.0
        %1364 = vmatprep.subr.mxu0 0.0
        %1365 = vmatpush1.msra.mxu0 0.0
        %1366 = vmatprep.subr.mxu0 0.0
        %1367 = vmatpush1.msra.mxu0 0.0
        %1368 = vmatprep.subr.mxu0 0.0
        %1369 = vmatpush1.msra.mxu0 0.0
        %1370 = vmatprep.subr.mxu0 0.0
        %1371 = vmatpush1.msra.mxu0 0.0
        %1372 = vmatprep.subr.mxu0 0.0
        %1373 = vmatpush1.msra.mxu0 0.0
        %1374 = vmatprep.subr.mxu0 0.0
        %1375 = vmatpush1.msra.mxu0 0.0
        %1376 = vmatprep.subr.mxu0 0.0
        %1377 = vmatpush1.msra.mxu0 0.0
        %1378 = vmatprep.mubr.f32.mxu0 0.0
        %1379 = vmatmul.mubr.f32.gmra.mrb[0].mxu0 %v1312
        %v1380 = vpop.f32.mrb[0].mxu0
        %v1381 = vadd.f32 %v513, %v1380
        %v1382 = vpop.f32.mrb[0].mxu0
        %1383 = vdwg.mxu0
        %v1384 = vsel %vm892, %v1381, -inf
        %1385 = vmax.xlane.f32.xlu0 %v1384
        %v1386 = vpop.xlane.xlu0 %1385
        %v1387 = vsub.f32 %v1381, %v1386
        %v1388 = vmul.f32 %v1387, 1.442695
        %v1389 = vpow.pop %v1388
        %v1390 = vsel %vm892, %v1389, 0.0
        %1391 = vadd.xlane.f32.xlu0 %v1390
        %v1392 = vpop.xlane.xlu0 %1391
        %v1393 = vrcp.pop %v1392
        %v1394 = vmul.f32 %v1389, %v1393
        %1395 = vrot.lane.b32.xlu0 %v810, 104
        %v1396 = vpop.permute.xlu0 %1395
        %1397 = vrot.lane.b32.xlu0 %v815, 104
        %v1398 = vpop.permute.xlu0 %1397
        %v1402 = vsel %vm892, %v1394, 0
        %1404 = vmatprep.subr.mxu0 0.0
        %1405 = vmatpush1.msra.mxu0 %v1396
        %1406 = vmatprep.subr.mxu0 0.0
        %1407 = vmatpush1.msra.mxu0 %v1398
        %1408 = vmatprep.subr.mxu0 0.0
        %1409 = vmatpush1.msra.mxu0 0.0
        %1410 = vmatprep.subr.mxu0 0.0
        %1411 = vmatpush1.msra.mxu0 0.0
        %1412 = vmatprep.subr.mxu0 0.0
        %1413 = vmatpush1.msra.mxu0 0.0
        %1414 = vmatprep.subr.mxu0 0.0
        %1415 = vmatpush1.msra.mxu0 0.0
        %1416 = vmatprep.subr.mxu0 0.0
        %1417 = vmatpush1.msra.mxu0 0.0
        %1418 = vmatprep.subr.mxu0 0.0
        %1419 = vmatpush1.msra.mxu0 0.0
        %1420 = vmatprep.subr.mxu0 0.0
        %1421 = vmatpush1.msra.mxu0 0.0
        %1422 = vmatprep.subr.mxu0 0.0
        %1423 = vmatpush1.msra.mxu0 0.0
        %1424 = vmatprep.subr.mxu0 0.0
        %1425 = vmatpush1.msra.mxu0 0.0
        %1426 = vmatprep.subr.mxu0 0.0
        %1427 = vmatpush1.msra.mxu0 0.0
        %1428 = vmatprep.subr.mxu0 0.0
        %1429 = vmatpush1.msra.mxu0 0.0
        %1430 = vmatprep.subr.mxu0 0.0
        %1431 = vmatpush1.msra.mxu0 0.0
        %1432 = vmatprep.subr.mxu0 0.0
        %1433 = vmatpush1.msra.mxu0 0.0
        %1434 = vmatprep.subr.mxu0 0.0
        %1435 = vmatpush1.msra.mxu0 0.0
        %1436 = vmatprep.subr.mxu0 0.0
        %1437 = vmatpush1.msra.mxu0 0.0
        %1438 = vmatprep.subr.mxu0 0.0
        %1439 = vmatpush1.msra.mxu0 0.0
        %1440 = vmatprep.subr.mxu0 0.0
        %1441 = vmatpush1.msra.mxu0 0.0
        %1442 = vmatprep.subr.mxu0 0.0
        %1443 = vmatpush1.msra.mxu0 0.0
        %1444 = vmatprep.subr.mxu0 0.0
        %1445 = vmatpush1.msra.mxu0 0.0
        %1446 = vmatprep.subr.mxu0 0.0
        %1447 = vmatpush1.msra.mxu0 0.0
        %1448 = vmatprep.subr.mxu0 0.0
        %1449 = vmatpush1.msra.mxu0 0.0
        %1450 = vmatprep.subr.mxu0 0.0
        %1451 = vmatpush1.msra.mxu0 0.0
        %1452 = vmatprep.subr.mxu0 0.0
        %1453 = vmatpush1.msra.mxu0 0.0
        %1454 = vmatprep.subr.mxu0 0.0
        %1455 = vmatpush1.msra.mxu0 0.0
        %1456 = vmatprep.subr.mxu0 0.0
        %1457 = vmatpush1.msra.mxu0 0.0
        %1458 = vmatprep.subr.mxu0 0.0
        %1459 = vmatpush1.msra.mxu0 0.0
        %1460 = vmatprep.subr.mxu0 0.0
        %1461 = vmatpush1.msra.mxu0 0.0
        %1462 = vmatprep.subr.mxu0 0.0
        %1463 = vmatpush1.msra.mxu0 0.0
        %1464 = vmatprep.subr.mxu0 0.0
        %1465 = vmatpush1.msra.mxu0 0.0
        %1466 = vmatprep.subr.mxu0 0.0
        %1467 = vmatpush1.msra.mxu0 0.0
        %1468 = vmatprep.mubr.f32.mxu0 0.0
        %1469 = vmatmul.mubr.f32.gmra.mrb[0].mxu0 %v1402
        %v1470 = vpop.f32.mrb[0].mxu0
        %v1471 = vadd.f32 0.0, %v1470
        %v1472 = vpop.f32.mrb[0].mxu0
        %1473 = vdwg.mxu0
        %v1474 = vadd.f32 %v1309, %v1394
        %1476 = vrot.lane.b32.xlu0 %v1141, 8
        %v1477 = vpop.permute.xlu0 %1476
        %1480 = vrot.lane.b32.xlu0 %v1306, 16
        %v1481 = vpop.permute.xlu0 %1480
        %1484 = vrot.lane.b32.xlu0 %v1471, 24
        %v1485 = vpop.permute.xlu0 %1484
        %v1487 = vsel %vm818, %v974, %v1477
        %v1488 = vsel %vm892, %v1487, %v1481
        %vm1489 = vcmask 195584
        %v1490 = vsel %vm1489, %v1488, %v1485
        %v1491 = vld [vmem:[%s7] sm:$0xff]
        %v1492 = vld [vmem:[%s7 + $0x8] sm:$0xff]
        %v1493 = vld [vmem:[%s7 + $0x10] sm:$0xff]
        %v1494 = vld [vmem:[%s7 + $0x18] sm:$0xff]
        %v1495 = vld [vmem:[%s11] sm:$0x1]
        %v1497 = vlaneseq
        %v1498 = vshrl.u32 %v1497, 7
        %v1499 = vsub.s32 0, %v1498
        %v1500 = vrot.slane %v1495, %v1499
        %v1503 = vsel %vm526, %v1490, 0
        %1505 = vmatprep.subr.mxu0 0.0
        %1506 = vmatpush1.msra.mxu0 %v1491
        %1507 = vmatprep.subr.mxu0 0.0
        %1508 = vmatpush1.msra.mxu0 %v1492
        %1509 = vmatprep.subr.mxu0 0.0
        %1510 = vmatpush1.msra.mxu0 %v1493
        %1511 = vmatprep.subr.mxu0 0.0
        %1512 = vmatpush1.msra.mxu0 %v1494
        %1513 = vmatprep.subr.mxu0 0.0
        %1514 = vmatpush1.msra.mxu0 0.0
        %1515 = vmatprep.subr.mxu0 0.0
        %1516 = vmatpush1.msra.mxu0 0.0
        %1517 = vmatprep.subr.mxu0 0.0
        %1518 = vmatpush1.msra.mxu0 0.0
        %1519 = vmatprep.subr.mxu0 0.0
        %1520 = vmatpush1.msra.mxu0 0.0
        %1521 = vmatprep.subr.mxu0 0.0
        %1522 = vmatpush1.msra.mxu0 0.0
        %1523 = vmatprep.subr.mxu0 0.0
        %1524 = vmatpush1.msra.mxu0 0.0
        %1525 = vmatprep.subr.mxu0 0.0
        %1526 = vmatpush1.msra.mxu0 0.0
        %1527 = vmatprep.subr.mxu0 0.0
        %1528 = vmatpush1.msra.mxu0 0.0
        %1529 = vmatprep.subr.mxu0 0.0
        %1530 = vmatpush1.msra.mxu0 0.0
        %1531 = vmatprep.subr.mxu0 0.0
        %1532 = vmatpush1.msra.mxu0 0.0
        %1533 = vmatprep.subr.mxu0 0.0
        %1534 = vmatpush1.msra.mxu0 0.0
        %1535 = vmatprep.subr.mxu0 0.0
        %1536 = vmatpush1.msra.mxu0 0.0
        %1537 = vmatprep.subr.mxu0 0.0
        %1538 = vmatpush1.msra.mxu0 0.0
        %1539 = vmatprep.subr.mxu0 0.0
        %1540 = vmatpush1.msra.mxu0 0.0
        %1541 = vmatprep.subr.mxu0 0.0
        %1542 = vmatpush1.msra.mxu0 0.0
        %1543 = vmatprep.subr.mxu0 0.0
        %1544 = vmatpush1.msra.mxu0 0.0
        %1545 = vmatprep.subr.mxu0 0.0
        %1546 = vmatpush1.msra.mxu0 0.0
        %1547 = vmatprep.subr.mxu0 0.0
        %1548 = vmatpush1.msra.mxu0 0.0
        %1549 = vmatprep.subr.mxu0 0.0
        %1550 = vmatpush1.msra.mxu0 0.0
        %1551 = vmatprep.subr.mxu0 0.0
        %1552 = vmatpush1.msra.mxu0 0.0
        %1553 = vmatprep.subr.mxu0 0.0
        %1554 = vmatpush1.msra.mxu0 0.0
        %1555 = vmatprep.subr.mxu0 0.0
        %1556 = vmatpush1.msra.mxu0 0.0
        %1557 = vmatprep.subr.mxu0 0.0
        %1558 = vmatpush1.msra.mxu0 0.0
        %1559 = vmatprep.subr.mxu0 0.0
        %1560 = vmatpush1.msra.mxu0 0.0
        %1561 = vmatprep.subr.mxu0 0.0
        %1562 = vmatpush1.msra.mxu0 0.0
        %1563 = vmatprep.subr.mxu0 0.0
        %1564 = vmatpush1.msra.mxu0 0.0
        %1565 = vmatprep.subr.mxu0 0.0
        %1566 = vmatpush1.msra.mxu0 0.0
        %1567 = vmatprep.subr.mxu0 0.0
        %1568 = vmatpush1.msra.mxu0 0.0
        %1569 = vmatprep.mubr.f32.mxu0 0.0
        %1570 = vmatmul.mubr.f32.gmra.mrb[0].mxu0 %v1503
        %v1571 = vpop.f32.mrb[0].mxu0
        %v1572 = vadd.f32 %v1500, %v1571
        %v1573 = vpop.f32.mrb[0].mxu0
        %1574 = vdwg.mxu0
        %1575 = vst.msk [vmem:[%s500] sm:$0xff] %vm526, %v1572
        %v1576 = vmul.f32 %v1474, 0.25
        %1577 = vst.msk [vmem:[%s479] sm:$0xff] %vm892, %v1576
        %p1578 = scmp.lt.s32.totalorder %s28, 1
        %s1579 = scalar_select %p1578, %s28, 1
        %s1580 = smul.addr %s1579, 8
        %s1581 = scalar_lea.vmem %s12, %s1580
        %s1582 = sand.u32 %s334, 1
        %s1583 = scalar_lea.sflag [#allocation3], %s1582
        %s1584 = sand.u32 %s334, 1
        %s1585 = smul.addr %s1584, 8
        %s1586 = scalar_lea.vmem [#allocation2], %s1585
        // Predicated region
        $region69: #{flat_han_attention.1} parent=67 // pred_check
          %p1587 = pneg %p318
        $region70: #{flat_han_attention.1} parent=67 // pred_check_branch
          %1589 = sbr.rel (%p1587) target = $region72
        $region71: #{flat_han_attention.1} parent=67 // pred_region
          _
        $region72: #{flat_han_attention.1} parent=67 // pred_fallthru
          _
        // Predicated region
        $region73: #{flat_han_attention.1} parent=67 // pred_check
          %p1590 = pneg %p344
        $region74: #{flat_han_attention.1} parent=67 // pred_check_branch
          %1592 = sbr.rel (%p1590) target = $region76
        $region75: #{flat_han_attention.1} parent=67 // pred_region
          %s1594 = ssub.s32 128, 128
          %1595 = vsyncadd %s1583, %s1594
          %s1596 = smul.addr %s28, 128
          %s1597 = scalar_lea.hbm %s13, %s1596
          %s1599 = sshll.u32 %s1586, 4
          %s1600 = int_to_ptr.vmem [resolvable:$true] %s1599
          %1602 = dma.vmem_to_hbm [thread:$0]  %s1600, 128, %s1597, %s1583
        $region76: #{flat_han_attention.1} parent=67 // pred_fallthru
          _
      $region68: #{flat_han_attention.1} parent=5 // pred_fallthru
        _
      %p1603 = scmp.le.s32.totalorder 2, %s23
      // Predicated region
      $region77: #{flat_han_attention.1} parent=5 // pred_check
        %p1604 = pneg %p1603
      $region78: #{flat_han_attention.1} parent=5 // pred_check_branch
        %1606 = sbr.rel (%p1604) target = $region80
      $region79: #{flat_han_attention.1} parent=5 // pred_region
        %s1607 = ssub.s32 %s23, 2
        // Predicated region
        $region81: #{flat_han_attention.1} parent=79 // pred_check
          %p1608 = pneg %p324
        $region82: #{flat_han_attention.1} parent=79 // pred_check_branch
          %1610 = sbr.rel (%p1608) target = $region84
        $region83: #{flat_han_attention.1} parent=79 // pred_region
          %p1611 = scmp.lt.s32.totalorder %s29, 1
          %s1612 = scalar_select %p1611, %s29, 1
          %s1613 = smul.addr %s1612, 8
          %s1614 = scalar_lea.vmem %s12, %s1613
        $region84: #{flat_han_attention.1} parent=79 // pred_fallthru
          _
        // Predicated region
        $region85: #{flat_han_attention.1} parent=79 // pred_check
          %p1615 = pneg %p350
        $region86: #{flat_han_attention.1} parent=79 // pred_check_branch
          %1617 = sbr.rel (%p1615) target = $region88
        $region87: #{flat_han_attention.1} parent=79 // pred_region
          %s1618 = sand.u32 %s335, 1
          %s1619 = scalar_lea.sflag [#allocation3], %s1618
          %s1620 = sand.u32 %s335, 1
          %s1621 = smul.addr %s1620, 8
          %s1622 = scalar_lea.vmem [#allocation2], %s1621
          %1623 = dma.done %s1619, 128
        $region88: #{flat_han_attention.1} parent=79 // pred_fallthru
          _
      $region80: #{flat_han_attention.1} parent=5 // pred_fallthru
        _
    $region6: #{flat_han_attention.1} parent=1 // loop_footer
      %s27 = sadd.s32 1, %s23
    $region7: #{flat_han_attention.1} parent=1 // loop_footer_branch
      %22 = sbr.rel target = $region3
    $region8: #{flat_han_attention.1} parent=1 // loop_exit
      _
    %1624 = vsyncpa [#allocation3], 1
    %s1625 = scalar_lea.sflag [#allocation3], 1
    %1626 = vsyncpa %s1625, 1

</llo_original>
